<compile_context>
chip_gen: v6e
topology: v6e:2x2x1
jax: 0.10.0
libtpu: 0.0.40
codegen_flags: <defaults>
</compile_context>

<pallas_src>
import functools

import jax
import jax.numpy as jnp
import numpy as np
from jax.experimental import pallas as pl
from jax.experimental.pallas import tpu as pltpu


def _cdiv(a, b):
    return -(-a // b)


def _eos_rows_kernel(rowsel_ref, logits_ref, out_ref, buf, sem, *,
                     B, BB, V, n_inner, eos_idx):
    """One grid step = one group of BB expected-EOS rows.

    rowsel_ref : SMEM (B,) int32   flat row index b*T + clip(len_b-1, 0, T-1)
    logits_ref : HBM  (B*T, V)     raw logits (memory_space=pl.ANY)
    out_ref    : VMEM (BB, 1) f32  softmax(row)[eos_idx] per row of the group
    buf        : VMEM (2, BB, V)   double-buffered row scratch (input dtype)
    sem        : DMA sems (2, BB)
    """
    o = pl.program_id(0)
    i = pl.program_id(1)
    g = o * n_inner + i          # global row-group index
    slot = i % 2

    def row_dma(group, r, slot_):
        b = group * BB + r
        # Clamp the SMEM index defensively (the call sites are already guarded
        # by b < B, clamping just keeps any hoisted scalar read in-bounds).
        row = rowsel_ref[jnp.minimum(b, B - 1)]
        return pltpu.make_async_copy(
            logits_ref.at[row], buf.at[slot_, r], sem.at[slot_, r])

    def issue_group(group, slot_):
        for r in range(BB):
            b = group * BB + r

            @pl.when(b < B)
            def _():
                row_dma(group, r, slot_).start()

    def wait_group(group, slot_):
        for r in range(BB):
            b = group * BB + r

            @pl.when(b < B)
            def _():
                row_dma(group, r, slot_).wait()

    # Prime the pipeline on the first inner step of this core's slice.
    @pl.when(i == 0)
    def _prime():
        issue_group(g, slot)

    # Prefetch the next group's rows into the other slot (overlaps with the
    # current group's compute; skipped on the last inner step).
    @pl.when(i + 1 < n_inner)
    def _prefetch():
        issue_group(g + 1, 1 - slot)

    wait_group(g, slot)

    # Full row is resident -> plain single-pass softmax (cast to f32 in-reg).
    x = buf[slot].astype(jnp.float32)                       # (BB, V)
    m = jnp.max(x, axis=-1, keepdims=True)                  # (BB, 1)
    denom = jnp.sum(jnp.exp(x - m), axis=-1, keepdims=True)  # (BB, 1)

    # EOS logit via a masked reduce over only the 128-lane group holding it.
    lane_base = (eos_idx // 128) * 128
    lane_hi = min(lane_base + 128, V)
    xs = x[:, lane_base:lane_hi]                            # (BB, <=128)
    col = jax.lax.broadcasted_iota(jnp.int32, xs.shape, 1) + lane_base
    x_eos = jnp.sum(jnp.where(col == eos_idx, xs, 0.0),
                    axis=-1, keepdims=True)                 # (BB, 1)

    out_ref[...] = jnp.exp(x_eos - m) / denom


def eos_encouragement_loss(logits, targets, target_lengths, *, eos_idx,
                           bonus_weight=0.1):
    """Pallas TPU implementation of EOSEncouragementLoss.forward.

    logits:         [B, T, V] float (f32 or bf16)
    targets:        [B, T]    (unused by the reference forward; API parity)
    target_lengths: [B]       int
    returns scalar f32:
        -(sum_b [len_b > 1 and len_b-1 < T] * softmax(logits[b, len_b-1])[eos]) * w / B
    """
    del targets  # unused by the reference forward
    B, T, V = logits.shape
    eos_idx = int(eos_idx)
    if not 0 <= eos_idx < V:
        raise ValueError(f"eos_idx={eos_idx} out of range for vocab size {V}")

    lens = target_lengths.astype(jnp.int32)
    pos = jnp.clip(lens - 1, 0, T - 1).astype(jnp.int32)            # [B]
    valid = jnp.logical_and(lens > 1, (lens - 1) < T)                # [B]
    # Flat row selector into the (B*T, V) view of logits.
    rowsel = (jnp.arange(B, dtype=jnp.int32) * T + pos)              # [B]

    # Row-group size: native sublane packing for the input dtype, but drop to
    # 8 if that is what it takes to give v7x's second TensorCore a group.
    itemsize = jnp.dtype(logits.dtype).itemsize
    BB = {1: 32, 2: 16}.get(itemsize, 8)
    if B <= 8 or _cdiv(B, BB) < 2:
        BB = 8  # smallest block that keeps the (8,128) sublane rule satisfied
    n_groups = _cdiv(B, BB)
    n_outer = 2 if n_groups >= 2 else 1      # "parallel" axis for v7x megacore
    n_inner = _cdiv(n_groups, n_outer)       # sequential axis (manual prefetch)
    B_pad = n_outer * n_inner * BB           # padded rows: DMAs skipped, output dropped

    # VMEM budget: double-buffered rows + f32 temporaries.  Only raise the
    # scoped limit when actually needed; cap below v7x's 64 MiB physical VMEM.
    vmem_need = 2 * BB * V * itemsize + 2 * BB * V * 4 + (1 << 20)
    vmem_limit = None
    if vmem_need > (12 << 20):
        vmem_limit = min(int(vmem_need * 1.25), 48 << 20)
    # Note: for vocabularies so large that a BBxV f32 row group exceeds this
    # budget, the V axis would need chunking with an online softmax.

    kernel = functools.partial(
        _eos_rows_kernel, B=B, BB=BB, V=V, n_inner=n_inner, eos_idx=eos_idx)

    probs = pl.pallas_call(
        kernel,
        out_shape=jax.ShapeDtypeStruct((B_pad, 1), jnp.float32),
        grid_spec=pltpu.PrefetchScalarGridSpec(
            num_scalar_prefetch=1,                       # rowsel -> SMEM
            grid=(n_outer, n_inner),
            in_specs=[pl.BlockSpec(memory_space=pl.ANY)],  # logits stay in HBM
            out_specs=pl.BlockSpec(
                (BB, 1), lambda o, i, rowsel: (o * n_inner + i, 0)),
            scratch_shapes=[
                pltpu.VMEM((2, BB, V), logits.dtype),
                pltpu.SemaphoreType.DMA((2, BB)),
            ],
        ),
        compiler_params=pltpu.CompilerParams(
            dimension_semantics=("parallel", "arbitrary"),
            vmem_limit_bytes=vmem_limit,
        ),
    )(rowsel, logits.reshape(B * T, V))

    # Tiny finalize in the wrapper: validity mask, bonus weight, mean over B.
    scale = jnp.where(valid, jnp.float32(bonus_weight), jnp.float32(0.0))
    return -jnp.sum(probs[:B, 0] * scale) / B


def _reference_loss(logits, target_lengths, eos_idx, bonus_weight):
    """Pure-NumPy port of the PyTorch forward (for validation)."""
    x = np.asarray(jnp.asarray(logits, jnp.float32))
    lens = np.asarray(target_lengths)
    B, T, _ = x.shape
    total = 0.0
    for b in range(B):
        tl = int(lens[b])
        if tl > 1 and (tl - 1) < T:
            row = x[b, tl - 1]
            row = row - row.max()
            p = np.exp(row)
            p /= p.sum()
            total += float(p[eos_idx]) * bonus_weight
    return np.float32(-total / B)


if __name__ == "__main__":
    key = jax.random.PRNGKey(0)

    # ---- Config 1: small f32, single row group, degenerate lengths. ----
    B1, T1, V1 = 3, 8, 128
    EOS1, W1 = 3, 0.1
    k1, k2, key = jax.random.split(key, 3)
    logits1 = jax.random.normal(k1, (B1, T1, V1), dtype=jnp.float32)
    targets1 = jax.random.randint(k2, (B1, T1), 0, V1, dtype=jnp.int32)
    # One valid length (5), one degenerate (1), one whose EOS position falls
    # outside T (20 > T) -- the last two must contribute nothing.
    lengths1 = jnp.array([5, 1, 20], dtype=jnp.int32)

    loss_fn1 = jax.jit(functools.partial(
        eos_encouragement_loss, eos_idx=EOS1, bonus_weight=W1))
    loss1 = jax.block_until_ready(loss_fn1(logits1, targets1, lengths1))
    ref1 = _reference_loss(logits1, lengths1, EOS1, W1)
    np.testing.assert_allclose(np.asarray(loss1), ref1, rtol=1e-5, atol=1e-6)

    # ---- Config 2: bf16, ragged vocab, multiple row groups, both grid axes
    #      >1 so the parallel split and the cross-step prefetch are exercised.
    B2, T2, V2 = 33, 5, 392
    EOS2, W2 = 257, 0.05
    k3, k4, k5, key = jax.random.split(key, 4)
    logits2 = jax.random.normal(k3, (B2, T2, V2), dtype=jnp.bfloat16)
    targets2 = jax.random.randint(k4, (B2, T2), 0, V2, dtype=jnp.int32)
    lengths2 = jax.random.randint(k5, (B2,), 0, 9, dtype=jnp.int32)  # mixes valid/invalid

    loss_fn2 = jax.jit(functools.partial(
        eos_encouragement_loss, eos_idx=EOS2, bonus_weight=W2))
    loss2 = jax.block_until_ready(loss_fn2(logits2, targets2, lengths2))
    ref2 = _reference_loss(logits2, lengths2, EOS2, W2)
    np.testing.assert_allclose(np.asarray(loss2), ref2, rtol=1e-5, atol=1e-6)

    print("KERNEL_OK")
</pallas_src>

<mosaic_0001>
module attributes {stable_mosaic.version = 11 : i64} {
  func.func @_eos_rows_kernel(%arg0: i32, %arg1: i32, %arg2: memref<3xi32, #tpu.memory_space<smem>>, %arg3: memref<24x128xf32, #tpu.memory_space<any>>, %arg4: memref<8x1xf32, #tpu.memory_space<vmem>>, %arg5: memref<2x8x128xf32, #tpu.memory_space<vmem>>, %arg6: memref<2x8x!tpu.dma_semaphore, #tpu.memory_space<semaphore_mem>>) attributes {dimension_semantics = [#tpu.dimension_semantics<parallel>, #tpu.dimension_semantics<arbitrary>], iteration_bounds = array<i64: 1, 1>, scalar_prefetch = 1 : i64, scratch_operands = 2 : i64, tpu.core_type = #tpu.core_type<tc>, window_params = [{}, {transform_indices = @transform_1, window_bounds = array<i64: 8, 1>}]} {
    %c1_i32 = arith.constant 1 : i32
    %0 = arith.muli %arg0, %c1_i32 : i32
    %1 = arith.addi %0, %arg1 : i32
    %c2_i32 = arith.constant 2 : i32
    %c0_i32 = arith.constant 0 : i32
    %2 = arith.cmpi eq, %c2_i32, %c0_i32 : i32
    %c1_i32_0 = arith.constant 1 : i32
    %3 = arith.select %2, %c1_i32_0, %c2_i32 : i32
    %4 = arith.remsi %arg1, %3 : i32
    %c0_i32_1 = arith.constant 0 : i32
    %5 = arith.cmpi ne, %4, %c0_i32_1 : i32
    %c0_i32_2 = arith.constant 0 : i32
    %6 = arith.cmpi slt, %4, %c0_i32_2 : i32
    %c0_i32_3 = arith.constant 0 : i32
    %7 = arith.cmpi slt, %3, %c0_i32_3 : i32
    %8 = arith.xori %6, %7 : i1
    %9 = arith.andi %8, %5 : i1
    %10 = arith.addi %4, %3 : i32
    %11 = arith.select %9, %10, %4 : i32
    %c0_i32_4 = arith.constant 0 : i32
    %12 = arith.cmpi eq, %arg1, %c0_i32_4 : i32
    %13 = arith.extui %12 : i1 to i32
    %c0_i32_5 = arith.constant 0 : i32
    %14 = arith.cmpi ne, %13, %c0_i32_5 : i32
    scf.if %14 {
      %c8_i32_43 = arith.constant 8 : i32
      %82 = arith.muli %1, %c8_i32_43 : i32
      %c0_i32_44 = arith.constant 0 : i32
      %83 = arith.addi %82, %c0_i32_44 : i32
      %c3_i32_45 = arith.constant 3 : i32
      %84 = arith.cmpi slt, %83, %c3_i32_45 : i32
      %85 = arith.extui %84 : i1 to i32
      %c0_i32_46 = arith.constant 0 : i32
      %86 = arith.cmpi ne, %85, %c0_i32_46 : i32
      scf.if %86 {
        %c8_i32_75 = arith.constant 8 : i32
        %122 = arith.muli %1, %c8_i32_75 : i32
        %c0_i32_76 = arith.constant 0 : i32
        %123 = arith.addi %122, %c0_i32_76 : i32
        %c2_i32_77 = arith.constant 2 : i32
        %124 = arith.minsi %123, %c2_i32_77 : i32
        %125 = arith.index_cast %124 : i32 to index
        %126 = memref.load %arg2[%125] : memref<3xi32, #tpu.memory_space<smem>>
        %c0_i32_78 = arith.constant 0 : i32
        %c0_i32_79 = arith.constant 0 : i32
        %c0_i32_80 = arith.constant 0 : i32
        %127 = tpu.memref_slice %arg3[%126, %c0_i32_80] : memref<24x128xf32, #tpu.memory_space<any>> -> memref<1x128xf32, #tpu.memory_space<any>>
        %128 = tpu.memref_squeeze %127 : memref<1x128xf32, #tpu.memory_space<any>> -> memref<128xf32, #tpu.memory_space<any>>
        %c0_i32_81 = arith.constant 0 : i32
        %129 = tpu.memref_slice %arg5[%11, %c0_i32_78, %c0_i32_81] : memref<2x8x128xf32, #tpu.memory_space<vmem>> -> memref<1x1x128xf32, #tpu.memory_space<vmem>>
        %130 = tpu.memref_squeeze %129 : memref<1x1x128xf32, #tpu.memory_space<vmem>> -> memref<128xf32, #tpu.memory_space<vmem>>
        %131 = tpu.memref_slice %arg6[%11, %c0_i32_79] : memref<2x8x!tpu.dma_semaphore, #tpu.memory_space<semaphore_mem>> -> memref<1x1x!tpu.dma_semaphore, #tpu.memory_space<semaphore_mem>>
        %132 = tpu.memref_squeeze %131 : memref<1x1x!tpu.dma_semaphore, #tpu.memory_space<semaphore_mem>> -> memref<!tpu.dma_semaphore, #tpu.memory_space<semaphore_mem>>
        tpu.enqueue_dma source(%128 : memref<128xf32, #tpu.memory_space<any>>) target(%130 : memref<128xf32, #tpu.memory_space<vmem>>) target_semaphore(%132 : memref<!tpu.dma_semaphore, #tpu.memory_space<semaphore_mem>>)
      } else {
      }
      %c8_i32_47 = arith.constant 8 : i32
      %87 = arith.muli %1, %c8_i32_47 : i32
      %c1_i32_48 = arith.constant 1 : i32
      %88 = arith.addi %87, %c1_i32_48 : i32
      %c3_i32_49 = arith.constant 3 : i32
      %89 = arith.cmpi slt, %88, %c3_i32_49 : i32
      %90 = arith.extui %89 : i1 to i32
      %c0_i32_50 = arith.constant 0 : i32
      %91 = arith.cmpi ne, %90, %c0_i32_50 : i32
      scf.if %91 {
        %c8_i32_75 = arith.constant 8 : i32
        %122 = arith.muli %1, %c8_i32_75 : i32
        %c1_i32_76 = arith.constant 1 : i32
        %123 = arith.addi %122, %c1_i32_76 : i32
        %c2_i32_77 = arith.constant 2 : i32
        %124 = arith.minsi %123, %c2_i32_77 : i32
        %125 = arith.index_cast %124 : i32 to index
        %126 = memref.load %arg2[%125] : memref<3xi32, #tpu.memory_space<smem>>
        %c1_i32_78 = arith.constant 1 : i32
        %c1_i32_79 = arith.constant 1 : i32
        %c0_i32_80 = arith.constant 0 : i32
        %127 = tpu.memref_slice %arg3[%126, %c0_i32_80] : memref<24x128xf32, #tpu.memory_space<any>> -> memref<1x128xf32, #tpu.memory_space<any>>
        %128 = tpu.memref_squeeze %127 : memref<1x128xf32, #tpu.memory_space<any>> -> memref<128xf32, #tpu.memory_space<any>>
        %c0_i32_81 = arith.constant 0 : i32
        %129 = tpu.memref_slice %arg5[%11, %c1_i32_78, %c0_i32_81] : memref<2x8x128xf32, #tpu.memory_space<vmem>> -> memref<1x1x128xf32, #tpu.memory_space<vmem>>
        %130 = tpu.memref_squeeze %129 : memref<1x1x128xf32, #tpu.memory_space<vmem>> -> memref<128xf32, #tpu.memory_space<vmem>>
        %131 = tpu.memref_slice %arg6[%11, %c1_i32_79] : memref<2x8x!tpu.dma_semaphore, #tpu.memory_space<semaphore_mem>> -> memref<1x1x!tpu.dma_semaphore, #tpu.memory_space<semaphore_mem>>
        %132 = tpu.memref_squeeze %131 : memref<1x1x!tpu.dma_semaphore, #tpu.memory_space<semaphore_mem>> -> memref<!tpu.dma_semaphore, #tpu.memory_space<semaphore_mem>>
        tpu.enqueue_dma source(%128 : memref<128xf32, #tpu.memory_space<any>>) target(%130 : memref<128xf32, #tpu.memory_space<vmem>>) target_semaphore(%132 : memref<!tpu.dma_semaphore, #tpu.memory_space<semaphore_mem>>)
      } else {
      }
      %c8_i32_51 = arith.constant 8 : i32
      %92 = arith.muli %1, %c8_i32_51 : i32
      %c2_i32_52 = arith.constant 2 : i32
      %93 = arith.addi %92, %c2_i32_52 : i32
      %c3_i32_53 = arith.constant 3 : i32
      %94 = arith.cmpi slt, %93, %c3_i32_53 : i32
      %95 = arith.extui %94 : i1 to i32
      %c0_i32_54 = arith.constant 0 : i32
      %96 = arith.cmpi ne, %95, %c0_i32_54 : i32
      scf.if %96 {
        %c8_i32_75 = arith.constant 8 : i32
        %122 = arith.muli %1, %c8_i32_75 : i32
        %c2_i32_76 = arith.constant 2 : i32
        %123 = arith.addi %122, %c2_i32_76 : i32
        %c2_i32_77 = arith.constant 2 : i32
        %124 = arith.minsi %123, %c2_i32_77 : i32
        %125 = arith.index_cast %124 : i32 to index
        %126 = memref.load %arg2[%125] : memref<3xi32, #tpu.memory_space<smem>>
        %c2_i32_78 = arith.constant 2 : i32
        %c2_i32_79 = arith.constant 2 : i32
        %c0_i32_80 = arith.constant 0 : i32
        %127 = tpu.memref_slice %arg3[%126, %c0_i32_80] : memref<24x128xf32, #tpu.memory_space<any>> -> memref<1x128xf32, #tpu.memory_space<any>>
        %128 = tpu.memref_squeeze %127 : memref<1x128xf32, #tpu.memory_space<any>> -> memref<128xf32, #tpu.memory_space<any>>
        %c0_i32_81 = arith.constant 0 : i32
        %129 = tpu.memref_slice %arg5[%11, %c2_i32_78, %c0_i32_81] : memref<2x8x128xf32, #tpu.memory_space<vmem>> -> memref<1x1x128xf32, #tpu.memory_space<vmem>>
        %130 = tpu.memref_squeeze %129 : memref<1x1x128xf32, #tpu.memory_space<vmem>> -> memref<128xf32, #tpu.memory_space<vmem>>
        %131 = tpu.memref_slice %arg6[%11, %c2_i32_79] : memref<2x8x!tpu.dma_semaphore, #tpu.memory_space<semaphore_mem>> -> memref<1x1x!tpu.dma_semaphore, #tpu.memory_space<semaphore_mem>>
        %132 = tpu.memref_squeeze %131 : memref<1x1x!tpu.dma_semaphore, #tpu.memory_space<semaphore_mem>> -> memref<!tpu.dma_semaphore, #tpu.memory_space<semaphore_mem>>
        tpu.enqueue_dma source(%128 : memref<128xf32, #tpu.memory_space<any>>) target(%130 : memref<128xf32, #tpu.memory_space<vmem>>) target_semaphore(%132 : memref<!tpu.dma_semaphore, #tpu.memory_space<semaphore_mem>>)
      } else {
      }
      %c8_i32_55 = arith.constant 8 : i32
      %97 = arith.muli %1, %c8_i32_55 : i32
      %c3_i32_56 = arith.constant 3 : i32
      %98 = arith.addi %97, %c3_i32_56 : i32
      %c3_i32_57 = arith.constant 3 : i32
      %99 = arith.cmpi slt, %98, %c3_i32_57 : i32
      %100 = arith.extui %99 : i1 to i32
      %c0_i32_58 = arith.constant 0 : i32
      %101 = arith.cmpi ne, %100, %c0_i32_58 : i32
      scf.if %101 {
        %c8_i32_75 = arith.constant 8 : i32
        %122 = arith.muli %1, %c8_i32_75 : i32
        %c3_i32_76 = arith.constant 3 : i32
        %123 = arith.addi %122, %c3_i32_76 : i32
        %c2_i32_77 = arith.constant 2 : i32
        %124 = arith.minsi %123, %c2_i32_77 : i32
        %125 = arith.index_cast %124 : i32 to index
        %126 = memref.load %arg2[%125] : memref<3xi32, #tpu.memory_space<smem>>
        %c3_i32_78 = arith.constant 3 : i32
        %c3_i32_79 = arith.constant 3 : i32
        %c0_i32_80 = arith.constant 0 : i32
        %127 = tpu.memref_slice %arg3[%126, %c0_i32_80] : memref<24x128xf32, #tpu.memory_space<any>> -> memref<1x128xf32, #tpu.memory_space<any>>
        %128 = tpu.memref_squeeze %127 : memref<1x128xf32, #tpu.memory_space<any>> -> memref<128xf32, #tpu.memory_space<any>>
        %c0_i32_81 = arith.constant 0 : i32
        %129 = tpu.memref_slice %arg5[%11, %c3_i32_78, %c0_i32_81] : memref<2x8x128xf32, #tpu.memory_space<vmem>> -> memref<1x1x128xf32, #tpu.memory_space<vmem>>
        %130 = tpu.memref_squeeze %129 : memref<1x1x128xf32, #tpu.memory_space<vmem>> -> memref<128xf32, #tpu.memory_space<vmem>>
        %131 = tpu.memref_slice %arg6[%11, %c3_i32_79] : memref<2x8x!tpu.dma_semaphore, #tpu.memory_space<semaphore_mem>> -> memref<1x1x!tpu.dma_semaphore, #tpu.memory_space<semaphore_mem>>
        %132 = tpu.memref_squeeze %131 : memref<1x1x!tpu.dma_semaphore, #tpu.memory_space<semaphore_mem>> -> memref<!tpu.dma_semaphore, #tpu.memory_space<semaphore_mem>>
        tpu.enqueue_dma source(%128 : memref<128xf32, #tpu.memory_space<any>>) target(%130 : memref<128xf32, #tpu.memory_space<vmem>>) target_semaphore(%132 : memref<!tpu.dma_semaphore, #tpu.memory_space<semaphore_mem>>)
      } else {
      }
      %c8_i32_59 = arith.constant 8 : i32
      %102 = arith.muli %1, %c8_i32_59 : i32
      %c4_i32_60 = arith.constant 4 : i32
      %103 = arith.addi %102, %c4_i32_60 : i32
      %c3_i32_61 = arith.constant 3 : i32
      %104 = arith.cmpi slt, %103, %c3_i32_61 : i32
      %105 = arith.extui %104 : i1 to i32
      %c0_i32_62 = arith.constant 0 : i32
      %106 = arith.cmpi ne, %105, %c0_i32_62 : i32
      scf.if %106 {
        %c8_i32_75 = arith.constant 8 : i32
        %122 = arith.muli %1, %c8_i32_75 : i32
        %c4_i32_76 = arith.constant 4 : i32
        %123 = arith.addi %122, %c4_i32_76 : i32
        %c2_i32_77 = arith.constant 2 : i32
        %124 = arith.minsi %123, %c2_i32_77 : i32
        %125 = arith.index_cast %124 : i32 to index
        %126 = memref.load %arg2[%125] : memref<3xi32, #tpu.memory_space<smem>>
        %c4_i32_78 = arith.constant 4 : i32
        %c4_i32_79 = arith.constant 4 : i32
        %c0_i32_80 = arith.constant 0 : i32
        %127 = tpu.memref_slice %arg3[%126, %c0_i32_80] : memref<24x128xf32, #tpu.memory_space<any>> -> memref<1x128xf32, #tpu.memory_space<any>>
        %128 = tpu.memref_squeeze %127 : memref<1x128xf32, #tpu.memory_space<any>> -> memref<128xf32, #tpu.memory_space<any>>
        %c0_i32_81 = arith.constant 0 : i32
        %129 = tpu.memref_slice %arg5[%11, %c4_i32_78, %c0_i32_81] : memref<2x8x128xf32, #tpu.memory_space<vmem>> -> memref<1x1x128xf32, #tpu.memory_space<vmem>>
        %130 = tpu.memref_squeeze %129 : memref<1x1x128xf32, #tpu.memory_space<vmem>> -> memref<128xf32, #tpu.memory_space<vmem>>
        %131 = tpu.memref_slice %arg6[%11, %c4_i32_79] : memref<2x8x!tpu.dma_semaphore, #tpu.memory_space<semaphore_mem>> -> memref<1x1x!tpu.dma_semaphore, #tpu.memory_space<semaphore_mem>>
        %132 = tpu.memref_squeeze %131 : memref<1x1x!tpu.dma_semaphore, #tpu.memory_space<semaphore_mem>> -> memref<!tpu.dma_semaphore, #tpu.memory_space<semaphore_mem>>
        tpu.enqueue_dma source(%128 : memref<128xf32, #tpu.memory_space<any>>) target(%130 : memref<128xf32, #tpu.memory_space<vmem>>) target_semaphore(%132 : memref<!tpu.dma_semaphore, #tpu.memory_space<semaphore_mem>>)
      } else {
      }
      %c8_i32_63 = arith.constant 8 : i32
      %107 = arith.muli %1, %c8_i32_63 : i32
      %c5_i32_64 = arith.constant 5 : i32
      %108 = arith.addi %107, %c5_i32_64 : i32
      %c3_i32_65 = arith.constant 3 : i32
      %109 = arith.cmpi slt, %108, %c3_i32_65 : i32
      %110 = arith.extui %109 : i1 to i32
      %c0_i32_66 = arith.constant 0 : i32
      %111 = arith.cmpi ne, %110, %c0_i32_66 : i32
      scf.if %111 {
        %c8_i32_75 = arith.constant 8 : i32
        %122 = arith.muli %1, %c8_i32_75 : i32
        %c5_i32_76 = arith.constant 5 : i32
        %123 = arith.addi %122, %c5_i32_76 : i32
        %c2_i32_77 = arith.constant 2 : i32
        %124 = arith.minsi %123, %c2_i32_77 : i32
        %125 = arith.index_cast %124 : i32 to index
        %126 = memref.load %arg2[%125] : memref<3xi32, #tpu.memory_space<smem>>
        %c5_i32_78 = arith.constant 5 : i32
        %c5_i32_79 = arith.constant 5 : i32
        %c0_i32_80 = arith.constant 0 : i32
        %127 = tpu.memref_slice %arg3[%126, %c0_i32_80] : memref<24x128xf32, #tpu.memory_space<any>> -> memref<1x128xf32, #tpu.memory_space<any>>
        %128 = tpu.memref_squeeze %127 : memref<1x128xf32, #tpu.memory_space<any>> -> memref<128xf32, #tpu.memory_space<any>>
        %c0_i32_81 = arith.constant 0 : i32
        %129 = tpu.memref_slice %arg5[%11, %c5_i32_78, %c0_i32_81] : memref<2x8x128xf32, #tpu.memory_space<vmem>> -> memref<1x1x128xf32, #tpu.memory_space<vmem>>
        %130 = tpu.memref_squeeze %129 : memref<1x1x128xf32, #tpu.memory_space<vmem>> -> memref<128xf32, #tpu.memory_space<vmem>>
        %131 = tpu.memref_slice %arg6[%11, %c5_i32_79] : memref<2x8x!tpu.dma_semaphore, #tpu.memory_space<semaphore_mem>> -> memref<1x1x!tpu.dma_semaphore, #tpu.memory_space<semaphore_mem>>
        %132 = tpu.memref_squeeze %131 : memref<1x1x!tpu.dma_semaphore, #tpu.memory_space<semaphore_mem>> -> memref<!tpu.dma_semaphore, #tpu.memory_space<semaphore_mem>>
        tpu.enqueue_dma source(%128 : memref<128xf32, #tpu.memory_space<any>>) target(%130 : memref<128xf32, #tpu.memory_space<vmem>>) target_semaphore(%132 : memref<!tpu.dma_semaphore, #tpu.memory_space<semaphore_mem>>)
      } else {
      }
      %c8_i32_67 = arith.constant 8 : i32
      %112 = arith.muli %1, %c8_i32_67 : i32
      %c6_i32_68 = arith.constant 6 : i32
      %113 = arith.addi %112, %c6_i32_68 : i32
      %c3_i32_69 = arith.constant 3 : i32
      %114 = arith.cmpi slt, %113, %c3_i32_69 : i32
      %115 = arith.extui %114 : i1 to i32
      %c0_i32_70 = arith.constant 0 : i32
      %116 = arith.cmpi ne, %115, %c0_i32_70 : i32
      scf.if %116 {
        %c8_i32_75 = arith.constant 8 : i32
        %122 = arith.muli %1, %c8_i32_75 : i32
        %c6_i32_76 = arith.constant 6 : i32
        %123 = arith.addi %122, %c6_i32_76 : i32
        %c2_i32_77 = arith.constant 2 : i32
        %124 = arith.minsi %123, %c2_i32_77 : i32
        %125 = arith.index_cast %124 : i32 to index
        %126 = memref.load %arg2[%125] : memref<3xi32, #tpu.memory_space<smem>>
        %c6_i32_78 = arith.constant 6 : i32
        %c6_i32_79 = arith.constant 6 : i32
        %c0_i32_80 = arith.constant 0 : i32
        %127 = tpu.memref_slice %arg3[%126, %c0_i32_80] : memref<24x128xf32, #tpu.memory_space<any>> -> memref<1x128xf32, #tpu.memory_space<any>>
        %128 = tpu.memref_squeeze %127 : memref<1x128xf32, #tpu.memory_space<any>> -> memref<128xf32, #tpu.memory_space<any>>
        %c0_i32_81 = arith.constant 0 : i32
        %129 = tpu.memref_slice %arg5[%11, %c6_i32_78, %c0_i32_81] : memref<2x8x128xf32, #tpu.memory_space<vmem>> -> memref<1x1x128xf32, #tpu.memory_space<vmem>>
        %130 = tpu.memref_squeeze %129 : memref<1x1x128xf32, #tpu.memory_space<vmem>> -> memref<128xf32, #tpu.memory_space<vmem>>
        %131 = tpu.memref_slice %arg6[%11, %c6_i32_79] : memref<2x8x!tpu.dma_semaphore, #tpu.memory_space<semaphore_mem>> -> memref<1x1x!tpu.dma_semaphore, #tpu.memory_space<semaphore_mem>>
        %132 = tpu.memref_squeeze %131 : memref<1x1x!tpu.dma_semaphore, #tpu.memory_space<semaphore_mem>> -> memref<!tpu.dma_semaphore, #tpu.memory_space<semaphore_mem>>
        tpu.enqueue_dma source(%128 : memref<128xf32, #tpu.memory_space<any>>) target(%130 : memref<128xf32, #tpu.memory_space<vmem>>) target_semaphore(%132 : memref<!tpu.dma_semaphore, #tpu.memory_space<semaphore_mem>>)
      } else {
      }
      %c8_i32_71 = arith.constant 8 : i32
      %117 = arith.muli %1, %c8_i32_71 : i32
      %c7_i32_72 = arith.constant 7 : i32
      %118 = arith.addi %117, %c7_i32_72 : i32
      %c3_i32_73 = arith.constant 3 : i32
      %119 = arith.cmpi slt, %118, %c3_i32_73 : i32
      %120 = arith.extui %119 : i1 to i32
      %c0_i32_74 = arith.constant 0 : i32
      %121 = arith.cmpi ne, %120, %c0_i32_74 : i32
      scf.if %121 {
        %c8_i32_75 = arith.constant 8 : i32
        %122 = arith.muli %1, %c8_i32_75 : i32
        %c7_i32_76 = arith.constant 7 : i32
        %123 = arith.addi %122, %c7_i32_76 : i32
        %c2_i32_77 = arith.constant 2 : i32
        %124 = arith.minsi %123, %c2_i32_77 : i32
        %125 = arith.index_cast %124 : i32 to index
        %126 = memref.load %arg2[%125] : memref<3xi32, #tpu.memory_space<smem>>
        %c7_i32_78 = arith.constant 7 : i32
        %c7_i32_79 = arith.constant 7 : i32
        %c0_i32_80 = arith.constant 0 : i32
        %127 = tpu.memref_slice %arg3[%126, %c0_i32_80] : memref<24x128xf32, #tpu.memory_space<any>> -> memref<1x128xf32, #tpu.memory_space<any>>
        %128 = tpu.memref_squeeze %127 : memref<1x128xf32, #tpu.memory_space<any>> -> memref<128xf32, #tpu.memory_space<any>>
        %c0_i32_81 = arith.constant 0 : i32
        %129 = tpu.memref_slice %arg5[%11, %c7_i32_78, %c0_i32_81] : memref<2x8x128xf32, #tpu.memory_space<vmem>> -> memref<1x1x128xf32, #tpu.memory_space<vmem>>
        %130 = tpu.memref_squeeze %129 : memref<1x1x128xf32, #tpu.memory_space<vmem>> -> memref<128xf32, #tpu.memory_space<vmem>>
        %131 = tpu.memref_slice %arg6[%11, %c7_i32_79] : memref<2x8x!tpu.dma_semaphore, #tpu.memory_space<semaphore_mem>> -> memref<1x1x!tpu.dma_semaphore, #tpu.memory_space<semaphore_mem>>
        %132 = tpu.memref_squeeze %131 : memref<1x1x!tpu.dma_semaphore, #tpu.memory_space<semaphore_mem>> -> memref<!tpu.dma_semaphore, #tpu.memory_space<semaphore_mem>>
        tpu.enqueue_dma source(%128 : memref<128xf32, #tpu.memory_space<any>>) target(%130 : memref<128xf32, #tpu.memory_space<vmem>>) target_semaphore(%132 : memref<!tpu.dma_semaphore, #tpu.memory_space<semaphore_mem>>)
      } else {
      }
    } else {
    }
    %c1_i32_6 = arith.constant 1 : i32
    %15 = arith.addi %arg1, %c1_i32_6 : i32
    %c1_i32_7 = arith.constant 1 : i32
    %16 = arith.cmpi slt, %15, %c1_i32_7 : i32
    %17 = arith.extui %16 : i1 to i32
    %c0_i32_8 = arith.constant 0 : i32
    %18 = arith.cmpi ne, %17, %c0_i32_8 : i32
    scf.if %18 {
      %c1_i32_43 = arith.constant 1 : i32
      %82 = arith.addi %1, %c1_i32_43 : i32
      %c1_i32_44 = arith.constant 1 : i32
      %83 = arith.subi %c1_i32_44, %11 : i32
      %c8_i32_45 = arith.constant 8 : i32
      %84 = arith.muli %82, %c8_i32_45 : i32
      %c0_i32_46 = arith.constant 0 : i32
      %85 = arith.addi %84, %c0_i32_46 : i32
      %c3_i32_47 = arith.constant 3 : i32
      %86 = arith.cmpi slt, %85, %c3_i32_47 : i32
      %87 = arith.extui %86 : i1 to i32
      %c0_i32_48 = arith.constant 0 : i32
      %88 = arith.cmpi ne, %87, %c0_i32_48 : i32
      scf.if %88 {
        %c8_i32_77 = arith.constant 8 : i32
        %124 = arith.muli %82, %c8_i32_77 : i32
        %c0_i32_78 = arith.constant 0 : i32
        %125 = arith.addi %124, %c0_i32_78 : i32
        %c2_i32_79 = arith.constant 2 : i32
        %126 = arith.minsi %125, %c2_i32_79 : i32
        %127 = arith.index_cast %126 : i32 to index
        %128 = memref.load %arg2[%127] : memref<3xi32, #tpu.memory_space<smem>>
        %c0_i32_80 = arith.constant 0 : i32
        %c0_i32_81 = arith.constant 0 : i32
        %c0_i32_82 = arith.constant 0 : i32
        %129 = tpu.memref_slice %arg3[%128, %c0_i32_82] : memref<24x128xf32, #tpu.memory_space<any>> -> memref<1x128xf32, #tpu.memory_space<any>>
        %130 = tpu.memref_squeeze %129 : memref<1x128xf32, #tpu.memory_space<any>> -> memref<128xf32, #tpu.memory_space<any>>
        %c0_i32_83 = arith.constant 0 : i32
        %131 = tpu.memref_slice %arg5[%83, %c0_i32_80, %c0_i32_83] : memref<2x8x128xf32, #tpu.memory_space<vmem>> -> memref<1x1x128xf32, #tpu.memory_space<vmem>>
        %132 = tpu.memref_squeeze %131 : memref<1x1x128xf32, #tpu.memory_space<vmem>> -> memref<128xf32, #tpu.memory_space<vmem>>
        %133 = tpu.memref_slice %arg6[%83, %c0_i32_81] : memref<2x8x!tpu.dma_semaphore, #tpu.memory_space<semaphore_mem>> -> memref<1x1x!tpu.dma_semaphore, #tpu.memory_space<semaphore_mem>>
        %134 = tpu.memref_squeeze %133 : memref<1x1x!tpu.dma_semaphore, #tpu.memory_space<semaphore_mem>> -> memref<!tpu.dma_semaphore, #tpu.memory_space<semaphore_mem>>
        tpu.enqueue_dma source(%130 : memref<128xf32, #tpu.memory_space<any>>) target(%132 : memref<128xf32, #tpu.memory_space<vmem>>) target_semaphore(%134 : memref<!tpu.dma_semaphore, #tpu.memory_space<semaphore_mem>>)
      } else {
      }
      %c8_i32_49 = arith.constant 8 : i32
      %89 = arith.muli %82, %c8_i32_49 : i32
      %c1_i32_50 = arith.constant 1 : i32
      %90 = arith.addi %89, %c1_i32_50 : i32
      %c3_i32_51 = arith.constant 3 : i32
      %91 = arith.cmpi slt, %90, %c3_i32_51 : i32
      %92 = arith.extui %91 : i1 to i32
      %c0_i32_52 = arith.constant 0 : i32
      %93 = arith.cmpi ne, %92, %c0_i32_52 : i32
      scf.if %93 {
        %c8_i32_77 = arith.constant 8 : i32
        %124 = arith.muli %82, %c8_i32_77 : i32
        %c1_i32_78 = arith.constant 1 : i32
        %125 = arith.addi %124, %c1_i32_78 : i32
        %c2_i32_79 = arith.constant 2 : i32
        %126 = arith.minsi %125, %c2_i32_79 : i32
        %127 = arith.index_cast %126 : i32 to index
        %128 = memref.load %arg2[%127] : memref<3xi32, #tpu.memory_space<smem>>
        %c1_i32_80 = arith.constant 1 : i32
        %c1_i32_81 = arith.constant 1 : i32
        %c0_i32_82 = arith.constant 0 : i32
        %129 = tpu.memref_slice %arg3[%128, %c0_i32_82] : memref<24x128xf32, #tpu.memory_space<any>> -> memref<1x128xf32, #tpu.memory_space<any>>
        %130 = tpu.memref_squeeze %129 : memref<1x128xf32, #tpu.memory_space<any>> -> memref<128xf32, #tpu.memory_space<any>>
        %c0_i32_83 = arith.constant 0 : i32
        %131 = tpu.memref_slice %arg5[%83, %c1_i32_80, %c0_i32_83] : memref<2x8x128xf32, #tpu.memory_space<vmem>> -> memref<1x1x128xf32, #tpu.memory_space<vmem>>
        %132 = tpu.memref_squeeze %131 : memref<1x1x128xf32, #tpu.memory_space<vmem>> -> memref<128xf32, #tpu.memory_space<vmem>>
        %133 = tpu.memref_slice %arg6[%83, %c1_i32_81] : memref<2x8x!tpu.dma_semaphore, #tpu.memory_space<semaphore_mem>> -> memref<1x1x!tpu.dma_semaphore, #tpu.memory_space<semaphore_mem>>
        %134 = tpu.memref_squeeze %133 : memref<1x1x!tpu.dma_semaphore, #tpu.memory_space<semaphore_mem>> -> memref<!tpu.dma_semaphore, #tpu.memory_space<semaphore_mem>>
        tpu.enqueue_dma source(%130 : memref<128xf32, #tpu.memory_space<any>>) target(%132 : memref<128xf32, #tpu.memory_space<vmem>>) target_semaphore(%134 : memref<!tpu.dma_semaphore, #tpu.memory_space<semaphore_mem>>)
      } else {
      }
      %c8_i32_53 = arith.constant 8 : i32
      %94 = arith.muli %82, %c8_i32_53 : i32
      %c2_i32_54 = arith.constant 2 : i32
      %95 = arith.addi %94, %c2_i32_54 : i32
      %c3_i32_55 = arith.constant 3 : i32
      %96 = arith.cmpi slt, %95, %c3_i32_55 : i32
      %97 = arith.extui %96 : i1 to i32
      %c0_i32_56 = arith.constant 0 : i32
      %98 = arith.cmpi ne, %97, %c0_i32_56 : i32
      scf.if %98 {
        %c8_i32_77 = arith.constant 8 : i32
        %124 = arith.muli %82, %c8_i32_77 : i32
        %c2_i32_78 = arith.constant 2 : i32
        %125 = arith.addi %124, %c2_i32_78 : i32
        %c2_i32_79 = arith.constant 2 : i32
        %126 = arith.minsi %125, %c2_i32_79 : i32
        %127 = arith.index_cast %126 : i32 to index
        %128 = memref.load %arg2[%127] : memref<3xi32, #tpu.memory_space<smem>>
        %c2_i32_80 = arith.constant 2 : i32
        %c2_i32_81 = arith.constant 2 : i32
        %c0_i32_82 = arith.constant 0 : i32
        %129 = tpu.memref_slice %arg3[%128, %c0_i32_82] : memref<24x128xf32, #tpu.memory_space<any>> -> memref<1x128xf32, #tpu.memory_space<any>>
        %130 = tpu.memref_squeeze %129 : memref<1x128xf32, #tpu.memory_space<any>> -> memref<128xf32, #tpu.memory_space<any>>
        %c0_i32_83 = arith.constant 0 : i32
        %131 = tpu.memref_slice %arg5[%83, %c2_i32_80, %c0_i32_83] : memref<2x8x128xf32, #tpu.memory_space<vmem>> -> memref<1x1x128xf32, #tpu.memory_space<vmem>>
        %132 = tpu.memref_squeeze %131 : memref<1x1x128xf32, #tpu.memory_space<vmem>> -> memref<128xf32, #tpu.memory_space<vmem>>
        %133 = tpu.memref_slice %arg6[%83, %c2_i32_81] : memref<2x8x!tpu.dma_semaphore, #tpu.memory_space<semaphore_mem>> -> memref<1x1x!tpu.dma_semaphore, #tpu.memory_space<semaphore_mem>>
        %134 = tpu.memref_squeeze %133 : memref<1x1x!tpu.dma_semaphore, #tpu.memory_space<semaphore_mem>> -> memref<!tpu.dma_semaphore, #tpu.memory_space<semaphore_mem>>
        tpu.enqueue_dma source(%130 : memref<128xf32, #tpu.memory_space<any>>) target(%132 : memref<128xf32, #tpu.memory_space<vmem>>) target_semaphore(%134 : memref<!tpu.dma_semaphore, #tpu.memory_space<semaphore_mem>>)
      } else {
      }
      %c8_i32_57 = arith.constant 8 : i32
      %99 = arith.muli %82, %c8_i32_57 : i32
      %c3_i32_58 = arith.constant 3 : i32
      %100 = arith.addi %99, %c3_i32_58 : i32
      %c3_i32_59 = arith.constant 3 : i32
      %101 = arith.cmpi slt, %100, %c3_i32_59 : i32
      %102 = arith.extui %101 : i1 to i32
      %c0_i32_60 = arith.constant 0 : i32
      %103 = arith.cmpi ne, %102, %c0_i32_60 : i32
      scf.if %103 {
        %c8_i32_77 = arith.constant 8 : i32
        %124 = arith.muli %82, %c8_i32_77 : i32
        %c3_i32_78 = arith.constant 3 : i32
        %125 = arith.addi %124, %c3_i32_78 : i32
        %c2_i32_79 = arith.constant 2 : i32
        %126 = arith.minsi %125, %c2_i32_79 : i32
        %127 = arith.index_cast %126 : i32 to index
        %128 = memref.load %arg2[%127] : memref<3xi32, #tpu.memory_space<smem>>
        %c3_i32_80 = arith.constant 3 : i32
        %c3_i32_81 = arith.constant 3 : i32
        %c0_i32_82 = arith.constant 0 : i32
        %129 = tpu.memref_slice %arg3[%128, %c0_i32_82] : memref<24x128xf32, #tpu.memory_space<any>> -> memref<1x128xf32, #tpu.memory_space<any>>
        %130 = tpu.memref_squeeze %129 : memref<1x128xf32, #tpu.memory_space<any>> -> memref<128xf32, #tpu.memory_space<any>>
        %c0_i32_83 = arith.constant 0 : i32
        %131 = tpu.memref_slice %arg5[%83, %c3_i32_80, %c0_i32_83] : memref<2x8x128xf32, #tpu.memory_space<vmem>> -> memref<1x1x128xf32, #tpu.memory_space<vmem>>
        %132 = tpu.memref_squeeze %131 : memref<1x1x128xf32, #tpu.memory_space<vmem>> -> memref<128xf32, #tpu.memory_space<vmem>>
        %133 = tpu.memref_slice %arg6[%83, %c3_i32_81] : memref<2x8x!tpu.dma_semaphore, #tpu.memory_space<semaphore_mem>> -> memref<1x1x!tpu.dma_semaphore, #tpu.memory_space<semaphore_mem>>
        %134 = tpu.memref_squeeze %133 : memref<1x1x!tpu.dma_semaphore, #tpu.memory_space<semaphore_mem>> -> memref<!tpu.dma_semaphore, #tpu.memory_space<semaphore_mem>>
        tpu.enqueue_dma source(%130 : memref<128xf32, #tpu.memory_space<any>>) target(%132 : memref<128xf32, #tpu.memory_space<vmem>>) target_semaphore(%134 : memref<!tpu.dma_semaphore, #tpu.memory_space<semaphore_mem>>)
      } else {
      }
      %c8_i32_61 = arith.constant 8 : i32
      %104 = arith.muli %82, %c8_i32_61 : i32
      %c4_i32_62 = arith.constant 4 : i32
      %105 = arith.addi %104, %c4_i32_62 : i32
      %c3_i32_63 = arith.constant 3 : i32
      %106 = arith.cmpi slt, %105, %c3_i32_63 : i32
      %107 = arith.extui %106 : i1 to i32
      %c0_i32_64 = arith.constant 0 : i32
      %108 = arith.cmpi ne, %107, %c0_i32_64 : i32
      scf.if %108 {
        %c8_i32_77 = arith.constant 8 : i32
        %124 = arith.muli %82, %c8_i32_77 : i32
        %c4_i32_78 = arith.constant 4 : i32
        %125 = arith.addi %124, %c4_i32_78 : i32
        %c2_i32_79 = arith.constant 2 : i32
        %126 = arith.minsi %125, %c2_i32_79 : i32
        %127 = arith.index_cast %126 : i32 to index
        %128 = memref.load %arg2[%127] : memref<3xi32, #tpu.memory_space<smem>>
        %c4_i32_80 = arith.constant 4 : i32
        %c4_i32_81 = arith.constant 4 : i32
        %c0_i32_82 = arith.constant 0 : i32
        %129 = tpu.memref_slice %arg3[%128, %c0_i32_82] : memref<24x128xf32, #tpu.memory_space<any>> -> memref<1x128xf32, #tpu.memory_space<any>>
        %130 = tpu.memref_squeeze %129 : memref<1x128xf32, #tpu.memory_space<any>> -> memref<128xf32, #tpu.memory_space<any>>
        %c0_i32_83 = arith.constant 0 : i32
        %131 = tpu.memref_slice %arg5[%83, %c4_i32_80, %c0_i32_83] : memref<2x8x128xf32, #tpu.memory_space<vmem>> -> memref<1x1x128xf32, #tpu.memory_space<vmem>>
        %132 = tpu.memref_squeeze %131 : memref<1x1x128xf32, #tpu.memory_space<vmem>> -> memref<128xf32, #tpu.memory_space<vmem>>
        %133 = tpu.memref_slice %arg6[%83, %c4_i32_81] : memref<2x8x!tpu.dma_semaphore, #tpu.memory_space<semaphore_mem>> -> memref<1x1x!tpu.dma_semaphore, #tpu.memory_space<semaphore_mem>>
        %134 = tpu.memref_squeeze %133 : memref<1x1x!tpu.dma_semaphore, #tpu.memory_space<semaphore_mem>> -> memref<!tpu.dma_semaphore, #tpu.memory_space<semaphore_mem>>
        tpu.enqueue_dma source(%130 : memref<128xf32, #tpu.memory_space<any>>) target(%132 : memref<128xf32, #tpu.memory_space<vmem>>) target_semaphore(%134 : memref<!tpu.dma_semaphore, #tpu.memory_space<semaphore_mem>>)
      } else {
      }
      %c8_i32_65 = arith.constant 8 : i32
      %109 = arith.muli %82, %c8_i32_65 : i32
      %c5_i32_66 = arith.constant 5 : i32
      %110 = arith.addi %109, %c5_i32_66 : i32
      %c3_i32_67 = arith.constant 3 : i32
      %111 = arith.cmpi slt, %110, %c3_i32_67 : i32
      %112 = arith.extui %111 : i1 to i32
      %c0_i32_68 = arith.constant 0 : i32
      %113 = arith.cmpi ne, %112, %c0_i32_68 : i32
      scf.if %113 {
        %c8_i32_77 = arith.constant 8 : i32
        %124 = arith.muli %82, %c8_i32_77 : i32
        %c5_i32_78 = arith.constant 5 : i32
        %125 = arith.addi %124, %c5_i32_78 : i32
        %c2_i32_79 = arith.constant 2 : i32
        %126 = arith.minsi %125, %c2_i32_79 : i32
        %127 = arith.index_cast %126 : i32 to index
        %128 = memref.load %arg2[%127] : memref<3xi32, #tpu.memory_space<smem>>
        %c5_i32_80 = arith.constant 5 : i32
        %c5_i32_81 = arith.constant 5 : i32
        %c0_i32_82 = arith.constant 0 : i32
        %129 = tpu.memref_slice %arg3[%128, %c0_i32_82] : memref<24x128xf32, #tpu.memory_space<any>> -> memref<1x128xf32, #tpu.memory_space<any>>
        %130 = tpu.memref_squeeze %129 : memref<1x128xf32, #tpu.memory_space<any>> -> memref<128xf32, #tpu.memory_space<any>>
        %c0_i32_83 = arith.constant 0 : i32
        %131 = tpu.memref_slice %arg5[%83, %c5_i32_80, %c0_i32_83] : memref<2x8x128xf32, #tpu.memory_space<vmem>> -> memref<1x1x128xf32, #tpu.memory_space<vmem>>
        %132 = tpu.memref_squeeze %131 : memref<1x1x128xf32, #tpu.memory_space<vmem>> -> memref<128xf32, #tpu.memory_space<vmem>>
        %133 = tpu.memref_slice %arg6[%83, %c5_i32_81] : memref<2x8x!tpu.dma_semaphore, #tpu.memory_space<semaphore_mem>> -> memref<1x1x!tpu.dma_semaphore, #tpu.memory_space<semaphore_mem>>
        %134 = tpu.memref_squeeze %133 : memref<1x1x!tpu.dma_semaphore, #tpu.memory_space<semaphore_mem>> -> memref<!tpu.dma_semaphore, #tpu.memory_space<semaphore_mem>>
        tpu.enqueue_dma source(%130 : memref<128xf32, #tpu.memory_space<any>>) target(%132 : memref<128xf32, #tpu.memory_space<vmem>>) target_semaphore(%134 : memref<!tpu.dma_semaphore, #tpu.memory_space<semaphore_mem>>)
      } else {
      }
      %c8_i32_69 = arith.constant 8 : i32
      %114 = arith.muli %82, %c8_i32_69 : i32
      %c6_i32_70 = arith.constant 6 : i32
      %115 = arith.addi %114, %c6_i32_70 : i32
      %c3_i32_71 = arith.constant 3 : i32
      %116 = arith.cmpi slt, %115, %c3_i32_71 : i32
      %117 = arith.extui %116 : i1 to i32
      %c0_i32_72 = arith.constant 0 : i32
      %118 = arith.cmpi ne, %117, %c0_i32_72 : i32
      scf.if %118 {
        %c8_i32_77 = arith.constant 8 : i32
        %124 = arith.muli %82, %c8_i32_77 : i32
        %c6_i32_78 = arith.constant 6 : i32
        %125 = arith.addi %124, %c6_i32_78 : i32
        %c2_i32_79 = arith.constant 2 : i32
        %126 = arith.minsi %125, %c2_i32_79 : i32
        %127 = arith.index_cast %126 : i32 to index
        %128 = memref.load %arg2[%127] : memref<3xi32, #tpu.memory_space<smem>>
        %c6_i32_80 = arith.constant 6 : i32
        %c6_i32_81 = arith.constant 6 : i32
        %c0_i32_82 = arith.constant 0 : i32
        %129 = tpu.memref_slice %arg3[%128, %c0_i32_82] : memref<24x128xf32, #tpu.memory_space<any>> -> memref<1x128xf32, #tpu.memory_space<any>>
        %130 = tpu.memref_squeeze %129 : memref<1x128xf32, #tpu.memory_space<any>> -> memref<128xf32, #tpu.memory_space<any>>
        %c0_i32_83 = arith.constant 0 : i32
        %131 = tpu.memref_slice %arg5[%83, %c6_i32_80, %c0_i32_83] : memref<2x8x128xf32, #tpu.memory_space<vmem>> -> memref<1x1x128xf32, #tpu.memory_space<vmem>>
        %132 = tpu.memref_squeeze %131 : memref<1x1x128xf32, #tpu.memory_space<vmem>> -> memref<128xf32, #tpu.memory_space<vmem>>
        %133 = tpu.memref_slice %arg6[%83, %c6_i32_81] : memref<2x8x!tpu.dma_semaphore, #tpu.memory_space<semaphore_mem>> -> memref<1x1x!tpu.dma_semaphore, #tpu.memory_space<semaphore_mem>>
        %134 = tpu.memref_squeeze %133 : memref<1x1x!tpu.dma_semaphore, #tpu.memory_space<semaphore_mem>> -> memref<!tpu.dma_semaphore, #tpu.memory_space<semaphore_mem>>
        tpu.enqueue_dma source(%130 : memref<128xf32, #tpu.memory_space<any>>) target(%132 : memref<128xf32, #tpu.memory_space<vmem>>) target_semaphore(%134 : memref<!tpu.dma_semaphore, #tpu.memory_space<semaphore_mem>>)
      } else {
      }
      %c8_i32_73 = arith.constant 8 : i32
      %119 = arith.muli %82, %c8_i32_73 : i32
      %c7_i32_74 = arith.constant 7 : i32
      %120 = arith.addi %119, %c7_i32_74 : i32
      %c3_i32_75 = arith.constant 3 : i32
      %121 = arith.cmpi slt, %120, %c3_i32_75 : i32
      %122 = arith.extui %121 : i1 to i32
      %c0_i32_76 = arith.constant 0 : i32
      %123 = arith.cmpi ne, %122, %c0_i32_76 : i32
      scf.if %123 {
        %c8_i32_77 = arith.constant 8 : i32
        %124 = arith.muli %82, %c8_i32_77 : i32
        %c7_i32_78 = arith.constant 7 : i32
        %125 = arith.addi %124, %c7_i32_78 : i32
        %c2_i32_79 = arith.constant 2 : i32
        %126 = arith.minsi %125, %c2_i32_79 : i32
        %127 = arith.index_cast %126 : i32 to index
        %128 = memref.load %arg2[%127] : memref<3xi32, #tpu.memory_space<smem>>
        %c7_i32_80 = arith.constant 7 : i32
        %c7_i32_81 = arith.constant 7 : i32
        %c0_i32_82 = arith.constant 0 : i32
        %129 = tpu.memref_slice %arg3[%128, %c0_i32_82] : memref<24x128xf32, #tpu.memory_space<any>> -> memref<1x128xf32, #tpu.memory_space<any>>
        %130 = tpu.memref_squeeze %129 : memref<1x128xf32, #tpu.memory_space<any>> -> memref<128xf32, #tpu.memory_space<any>>
        %c0_i32_83 = arith.constant 0 : i32
        %131 = tpu.memref_slice %arg5[%83, %c7_i32_80, %c0_i32_83] : memref<2x8x128xf32, #tpu.memory_space<vmem>> -> memref<1x1x128xf32, #tpu.memory_space<vmem>>
        %132 = tpu.memref_squeeze %131 : memref<1x1x128xf32, #tpu.memory_space<vmem>> -> memref<128xf32, #tpu.memory_space<vmem>>
        %133 = tpu.memref_slice %arg6[%83, %c7_i32_81] : memref<2x8x!tpu.dma_semaphore, #tpu.memory_space<semaphore_mem>> -> memref<1x1x!tpu.dma_semaphore, #tpu.memory_space<semaphore_mem>>
        %134 = tpu.memref_squeeze %133 : memref<1x1x!tpu.dma_semaphore, #tpu.memory_space<semaphore_mem>> -> memref<!tpu.dma_semaphore, #tpu.memory_space<semaphore_mem>>
        tpu.enqueue_dma source(%130 : memref<128xf32, #tpu.memory_space<any>>) target(%132 : memref<128xf32, #tpu.memory_space<vmem>>) target_semaphore(%134 : memref<!tpu.dma_semaphore, #tpu.memory_space<semaphore_mem>>)
      } else {
      }
    } else {
    }
    %c8_i32 = arith.constant 8 : i32
    %19 = arith.muli %1, %c8_i32 : i32
    %c0_i32_9 = arith.constant 0 : i32
    %20 = arith.addi %19, %c0_i32_9 : i32
    %c3_i32 = arith.constant 3 : i32
    %21 = arith.cmpi slt, %20, %c3_i32 : i32
    %22 = arith.extui %21 : i1 to i32
    %c0_i32_10 = arith.constant 0 : i32
    %23 = arith.cmpi ne, %22, %c0_i32_10 : i32
    scf.if %23 {
      %c8_i32_43 = arith.constant 8 : i32
      %82 = arith.muli %1, %c8_i32_43 : i32
      %c0_i32_44 = arith.constant 0 : i32
      %83 = arith.addi %82, %c0_i32_44 : i32
      %c2_i32_45 = arith.constant 2 : i32
      %84 = arith.minsi %83, %c2_i32_45 : i32
      %85 = arith.index_cast %84 : i32 to index
      %86 = memref.load %arg2[%85] : memref<3xi32, #tpu.memory_space<smem>>
      %c0_i32_46 = arith.constant 0 : i32
      %c0_i32_47 = arith.constant 0 : i32
      %c0_i32_48 = arith.constant 0 : i32
      %87 = tpu.memref_slice %arg3[%86, %c0_i32_48] : memref<24x128xf32, #tpu.memory_space<any>> -> memref<1x128xf32, #tpu.memory_space<any>>
      %88 = tpu.memref_squeeze %87 : memref<1x128xf32, #tpu.memory_space<any>> -> memref<128xf32, #tpu.memory_space<any>>
      %c0_i32_49 = arith.constant 0 : i32
      %89 = tpu.memref_slice %arg5[%11, %c0_i32_46, %c0_i32_49] : memref<2x8x128xf32, #tpu.memory_space<vmem>> -> memref<1x1x128xf32, #tpu.memory_space<vmem>>
      %90 = tpu.memref_squeeze %89 : memref<1x1x128xf32, #tpu.memory_space<vmem>> -> memref<128xf32, #tpu.memory_space<vmem>>
      %91 = tpu.memref_slice %arg6[%11, %c0_i32_47] : memref<2x8x!tpu.dma_semaphore, #tpu.memory_space<semaphore_mem>> -> memref<1x1x!tpu.dma_semaphore, #tpu.memory_space<semaphore_mem>>
      %92 = tpu.memref_squeeze %91 : memref<1x1x!tpu.dma_semaphore, #tpu.memory_space<semaphore_mem>> -> memref<!tpu.dma_semaphore, #tpu.memory_space<semaphore_mem>>
      tpu.wait_dma2 semaphore(%92 : memref<!tpu.dma_semaphore, #tpu.memory_space<semaphore_mem>>) src(%88 : memref<128xf32, #tpu.memory_space<any>>) dst(%90 : memref<128xf32, #tpu.memory_space<vmem>>)
    } else {
    }
    %c8_i32_11 = arith.constant 8 : i32
    %24 = arith.muli %1, %c8_i32_11 : i32
    %c1_i32_12 = arith.constant 1 : i32
    %25 = arith.addi %24, %c1_i32_12 : i32
    %c3_i32_13 = arith.constant 3 : i32
    %26 = arith.cmpi slt, %25, %c3_i32_13 : i32
    %27 = arith.extui %26 : i1 to i32
    %c0_i32_14 = arith.constant 0 : i32
    %28 = arith.cmpi ne, %27, %c0_i32_14 : i32
    scf.if %28 {
      %c8_i32_43 = arith.constant 8 : i32
      %82 = arith.muli %1, %c8_i32_43 : i32
      %c1_i32_44 = arith.constant 1 : i32
      %83 = arith.addi %82, %c1_i32_44 : i32
      %c2_i32_45 = arith.constant 2 : i32
      %84 = arith.minsi %83, %c2_i32_45 : i32
      %85 = arith.index_cast %84 : i32 to index
      %86 = memref.load %arg2[%85] : memref<3xi32, #tpu.memory_space<smem>>
      %c1_i32_46 = arith.constant 1 : i32
      %c1_i32_47 = arith.constant 1 : i32
      %c0_i32_48 = arith.constant 0 : i32
      %87 = tpu.memref_slice %arg3[%86, %c0_i32_48] : memref<24x128xf32, #tpu.memory_space<any>> -> memref<1x128xf32, #tpu.memory_space<any>>
      %88 = tpu.memref_squeeze %87 : memref<1x128xf32, #tpu.memory_space<any>> -> memref<128xf32, #tpu.memory_space<any>>
      %c0_i32_49 = arith.constant 0 : i32
      %89 = tpu.memref_slice %arg5[%11, %c1_i32_46, %c0_i32_49] : memref<2x8x128xf32, #tpu.memory_space<vmem>> -> memref<1x1x128xf32, #tpu.memory_space<vmem>>
      %90 = tpu.memref_squeeze %89 : memref<1x1x128xf32, #tpu.memory_space<vmem>> -> memref<128xf32, #tpu.memory_space<vmem>>
      %91 = tpu.memref_slice %arg6[%11, %c1_i32_47] : memref<2x8x!tpu.dma_semaphore, #tpu.memory_space<semaphore_mem>> -> memref<1x1x!tpu.dma_semaphore, #tpu.memory_space<semaphore_mem>>
      %92 = tpu.memref_squeeze %91 : memref<1x1x!tpu.dma_semaphore, #tpu.memory_space<semaphore_mem>> -> memref<!tpu.dma_semaphore, #tpu.memory_space<semaphore_mem>>
      tpu.wait_dma2 semaphore(%92 : memref<!tpu.dma_semaphore, #tpu.memory_space<semaphore_mem>>) src(%88 : memref<128xf32, #tpu.memory_space<any>>) dst(%90 : memref<128xf32, #tpu.memory_space<vmem>>)
    } else {
    }
    %c8_i32_15 = arith.constant 8 : i32
    %29 = arith.muli %1, %c8_i32_15 : i32
    %c2_i32_16 = arith.constant 2 : i32
    %30 = arith.addi %29, %c2_i32_16 : i32
    %c3_i32_17 = arith.constant 3 : i32
    %31 = arith.cmpi slt, %30, %c3_i32_17 : i32
    %32 = arith.extui %31 : i1 to i32
    %c0_i32_18 = arith.constant 0 : i32
    %33 = arith.cmpi ne, %32, %c0_i32_18 : i32
    scf.if %33 {
      %c8_i32_43 = arith.constant 8 : i32
      %82 = arith.muli %1, %c8_i32_43 : i32
      %c2_i32_44 = arith.constant 2 : i32
      %83 = arith.addi %82, %c2_i32_44 : i32
      %c2_i32_45 = arith.constant 2 : i32
      %84 = arith.minsi %83, %c2_i32_45 : i32
      %85 = arith.index_cast %84 : i32 to index
      %86 = memref.load %arg2[%85] : memref<3xi32, #tpu.memory_space<smem>>
      %c2_i32_46 = arith.constant 2 : i32
      %c2_i32_47 = arith.constant 2 : i32
      %c0_i32_48 = arith.constant 0 : i32
      %87 = tpu.memref_slice %arg3[%86, %c0_i32_48] : memref<24x128xf32, #tpu.memory_space<any>> -> memref<1x128xf32, #tpu.memory_space<any>>
      %88 = tpu.memref_squeeze %87 : memref<1x128xf32, #tpu.memory_space<any>> -> memref<128xf32, #tpu.memory_space<any>>
      %c0_i32_49 = arith.constant 0 : i32
      %89 = tpu.memref_slice %arg5[%11, %c2_i32_46, %c0_i32_49] : memref<2x8x128xf32, #tpu.memory_space<vmem>> -> memref<1x1x128xf32, #tpu.memory_space<vmem>>
      %90 = tpu.memref_squeeze %89 : memref<1x1x128xf32, #tpu.memory_space<vmem>> -> memref<128xf32, #tpu.memory_space<vmem>>
      %91 = tpu.memref_slice %arg6[%11, %c2_i32_47] : memref<2x8x!tpu.dma_semaphore, #tpu.memory_space<semaphore_mem>> -> memref<1x1x!tpu.dma_semaphore, #tpu.memory_space<semaphore_mem>>
      %92 = tpu.memref_squeeze %91 : memref<1x1x!tpu.dma_semaphore, #tpu.memory_space<semaphore_mem>> -> memref<!tpu.dma_semaphore, #tpu.memory_space<semaphore_mem>>
      tpu.wait_dma2 semaphore(%92 : memref<!tpu.dma_semaphore, #tpu.memory_space<semaphore_mem>>) src(%88 : memref<128xf32, #tpu.memory_space<any>>) dst(%90 : memref<128xf32, #tpu.memory_space<vmem>>)
    } else {
    }
    %c8_i32_19 = arith.constant 8 : i32
    %34 = arith.muli %1, %c8_i32_19 : i32
    %c3_i32_20 = arith.constant 3 : i32
    %35 = arith.addi %34, %c3_i32_20 : i32
    %c3_i32_21 = arith.constant 3 : i32
    %36 = arith.cmpi slt, %35, %c3_i32_21 : i32
    %37 = arith.extui %36 : i1 to i32
    %c0_i32_22 = arith.constant 0 : i32
    %38 = arith.cmpi ne, %37, %c0_i32_22 : i32
    scf.if %38 {
      %c8_i32_43 = arith.constant 8 : i32
      %82 = arith.muli %1, %c8_i32_43 : i32
      %c3_i32_44 = arith.constant 3 : i32
      %83 = arith.addi %82, %c3_i32_44 : i32
      %c2_i32_45 = arith.constant 2 : i32
      %84 = arith.minsi %83, %c2_i32_45 : i32
      %85 = arith.index_cast %84 : i32 to index
      %86 = memref.load %arg2[%85] : memref<3xi32, #tpu.memory_space<smem>>
      %c3_i32_46 = arith.constant 3 : i32
      %c3_i32_47 = arith.constant 3 : i32
      %c0_i32_48 = arith.constant 0 : i32
      %87 = tpu.memref_slice %arg3[%86, %c0_i32_48] : memref<24x128xf32, #tpu.memory_space<any>> -> memref<1x128xf32, #tpu.memory_space<any>>
      %88 = tpu.memref_squeeze %87 : memref<1x128xf32, #tpu.memory_space<any>> -> memref<128xf32, #tpu.memory_space<any>>
      %c0_i32_49 = arith.constant 0 : i32
      %89 = tpu.memref_slice %arg5[%11, %c3_i32_46, %c0_i32_49] : memref<2x8x128xf32, #tpu.memory_space<vmem>> -> memref<1x1x128xf32, #tpu.memory_space<vmem>>
      %90 = tpu.memref_squeeze %89 : memref<1x1x128xf32, #tpu.memory_space<vmem>> -> memref<128xf32, #tpu.memory_space<vmem>>
      %91 = tpu.memref_slice %arg6[%11, %c3_i32_47] : memref<2x8x!tpu.dma_semaphore, #tpu.memory_space<semaphore_mem>> -> memref<1x1x!tpu.dma_semaphore, #tpu.memory_space<semaphore_mem>>
      %92 = tpu.memref_squeeze %91 : memref<1x1x!tpu.dma_semaphore, #tpu.memory_space<semaphore_mem>> -> memref<!tpu.dma_semaphore, #tpu.memory_space<semaphore_mem>>
      tpu.wait_dma2 semaphore(%92 : memref<!tpu.dma_semaphore, #tpu.memory_space<semaphore_mem>>) src(%88 : memref<128xf32, #tpu.memory_space<any>>) dst(%90 : memref<128xf32, #tpu.memory_space<vmem>>)
    } else {
    }
    %c8_i32_23 = arith.constant 8 : i32
    %39 = arith.muli %1, %c8_i32_23 : i32
    %c4_i32 = arith.constant 4 : i32
    %40 = arith.addi %39, %c4_i32 : i32
    %c3_i32_24 = arith.constant 3 : i32
    %41 = arith.cmpi slt, %40, %c3_i32_24 : i32
    %42 = arith.extui %41 : i1 to i32
    %c0_i32_25 = arith.constant 0 : i32
    %43 = arith.cmpi ne, %42, %c0_i32_25 : i32
    scf.if %43 {
      %c8_i32_43 = arith.constant 8 : i32
      %82 = arith.muli %1, %c8_i32_43 : i32
      %c4_i32_44 = arith.constant 4 : i32
      %83 = arith.addi %82, %c4_i32_44 : i32
      %c2_i32_45 = arith.constant 2 : i32
      %84 = arith.minsi %83, %c2_i32_45 : i32
      %85 = arith.index_cast %84 : i32 to index
      %86 = memref.load %arg2[%85] : memref<3xi32, #tpu.memory_space<smem>>
      %c4_i32_46 = arith.constant 4 : i32
      %c4_i32_47 = arith.constant 4 : i32
      %c0_i32_48 = arith.constant 0 : i32
      %87 = tpu.memref_slice %arg3[%86, %c0_i32_48] : memref<24x128xf32, #tpu.memory_space<any>> -> memref<1x128xf32, #tpu.memory_space<any>>
      %88 = tpu.memref_squeeze %87 : memref<1x128xf32, #tpu.memory_space<any>> -> memref<128xf32, #tpu.memory_space<any>>
      %c0_i32_49 = arith.constant 0 : i32
      %89 = tpu.memref_slice %arg5[%11, %c4_i32_46, %c0_i32_49] : memref<2x8x128xf32, #tpu.memory_space<vmem>> -> memref<1x1x128xf32, #tpu.memory_space<vmem>>
      %90 = tpu.memref_squeeze %89 : memref<1x1x128xf32, #tpu.memory_space<vmem>> -> memref<128xf32, #tpu.memory_space<vmem>>
      %91 = tpu.memref_slice %arg6[%11, %c4_i32_47] : memref<2x8x!tpu.dma_semaphore, #tpu.memory_space<semaphore_mem>> -> memref<1x1x!tpu.dma_semaphore, #tpu.memory_space<semaphore_mem>>
      %92 = tpu.memref_squeeze %91 : memref<1x1x!tpu.dma_semaphore, #tpu.memory_space<semaphore_mem>> -> memref<!tpu.dma_semaphore, #tpu.memory_space<semaphore_mem>>
      tpu.wait_dma2 semaphore(%92 : memref<!tpu.dma_semaphore, #tpu.memory_space<semaphore_mem>>) src(%88 : memref<128xf32, #tpu.memory_space<any>>) dst(%90 : memref<128xf32, #tpu.memory_space<vmem>>)
    } else {
    }
    %c8_i32_26 = arith.constant 8 : i32
    %44 = arith.muli %1, %c8_i32_26 : i32
    %c5_i32 = arith.constant 5 : i32
    %45 = arith.addi %44, %c5_i32 : i32
    %c3_i32_27 = arith.constant 3 : i32
    %46 = arith.cmpi slt, %45, %c3_i32_27 : i32
    %47 = arith.extui %46 : i1 to i32
    %c0_i32_28 = arith.constant 0 : i32
    %48 = arith.cmpi ne, %47, %c0_i32_28 : i32
    scf.if %48 {
      %c8_i32_43 = arith.constant 8 : i32
      %82 = arith.muli %1, %c8_i32_43 : i32
      %c5_i32_44 = arith.constant 5 : i32
      %83 = arith.addi %82, %c5_i32_44 : i32
      %c2_i32_45 = arith.constant 2 : i32
      %84 = arith.minsi %83, %c2_i32_45 : i32
      %85 = arith.index_cast %84 : i32 to index
      %86 = memref.load %arg2[%85] : memref<3xi32, #tpu.memory_space<smem>>
      %c5_i32_46 = arith.constant 5 : i32
      %c5_i32_47 = arith.constant 5 : i32
      %c0_i32_48 = arith.constant 0 : i32
      %87 = tpu.memref_slice %arg3[%86, %c0_i32_48] : memref<24x128xf32, #tpu.memory_space<any>> -> memref<1x128xf32, #tpu.memory_space<any>>
      %88 = tpu.memref_squeeze %87 : memref<1x128xf32, #tpu.memory_space<any>> -> memref<128xf32, #tpu.memory_space<any>>
      %c0_i32_49 = arith.constant 0 : i32
      %89 = tpu.memref_slice %arg5[%11, %c5_i32_46, %c0_i32_49] : memref<2x8x128xf32, #tpu.memory_space<vmem>> -> memref<1x1x128xf32, #tpu.memory_space<vmem>>
      %90 = tpu.memref_squeeze %89 : memref<1x1x128xf32, #tpu.memory_space<vmem>> -> memref<128xf32, #tpu.memory_space<vmem>>
      %91 = tpu.memref_slice %arg6[%11, %c5_i32_47] : memref<2x8x!tpu.dma_semaphore, #tpu.memory_space<semaphore_mem>> -> memref<1x1x!tpu.dma_semaphore, #tpu.memory_space<semaphore_mem>>
      %92 = tpu.memref_squeeze %91 : memref<1x1x!tpu.dma_semaphore, #tpu.memory_space<semaphore_mem>> -> memref<!tpu.dma_semaphore, #tpu.memory_space<semaphore_mem>>
      tpu.wait_dma2 semaphore(%92 : memref<!tpu.dma_semaphore, #tpu.memory_space<semaphore_mem>>) src(%88 : memref<128xf32, #tpu.memory_space<any>>) dst(%90 : memref<128xf32, #tpu.memory_space<vmem>>)
    } else {
    }
    %c8_i32_29 = arith.constant 8 : i32
    %49 = arith.muli %1, %c8_i32_29 : i32
    %c6_i32 = arith.constant 6 : i32
    %50 = arith.addi %49, %c6_i32 : i32
    %c3_i32_30 = arith.constant 3 : i32
    %51 = arith.cmpi slt, %50, %c3_i32_30 : i32
    %52 = arith.extui %51 : i1 to i32
    %c0_i32_31 = arith.constant 0 : i32
    %53 = arith.cmpi ne, %52, %c0_i32_31 : i32
    scf.if %53 {
      %c8_i32_43 = arith.constant 8 : i32
      %82 = arith.muli %1, %c8_i32_43 : i32
      %c6_i32_44 = arith.constant 6 : i32
      %83 = arith.addi %82, %c6_i32_44 : i32
      %c2_i32_45 = arith.constant 2 : i32
      %84 = arith.minsi %83, %c2_i32_45 : i32
      %85 = arith.index_cast %84 : i32 to index
      %86 = memref.load %arg2[%85] : memref<3xi32, #tpu.memory_space<smem>>
      %c6_i32_46 = arith.constant 6 : i32
      %c6_i32_47 = arith.constant 6 : i32
      %c0_i32_48 = arith.constant 0 : i32
      %87 = tpu.memref_slice %arg3[%86, %c0_i32_48] : memref<24x128xf32, #tpu.memory_space<any>> -> memref<1x128xf32, #tpu.memory_space<any>>
      %88 = tpu.memref_squeeze %87 : memref<1x128xf32, #tpu.memory_space<any>> -> memref<128xf32, #tpu.memory_space<any>>
      %c0_i32_49 = arith.constant 0 : i32
      %89 = tpu.memref_slice %arg5[%11, %c6_i32_46, %c0_i32_49] : memref<2x8x128xf32, #tpu.memory_space<vmem>> -> memref<1x1x128xf32, #tpu.memory_space<vmem>>
      %90 = tpu.memref_squeeze %89 : memref<1x1x128xf32, #tpu.memory_space<vmem>> -> memref<128xf32, #tpu.memory_space<vmem>>
      %91 = tpu.memref_slice %arg6[%11, %c6_i32_47] : memref<2x8x!tpu.dma_semaphore, #tpu.memory_space<semaphore_mem>> -> memref<1x1x!tpu.dma_semaphore, #tpu.memory_space<semaphore_mem>>
      %92 = tpu.memref_squeeze %91 : memref<1x1x!tpu.dma_semaphore, #tpu.memory_space<semaphore_mem>> -> memref<!tpu.dma_semaphore, #tpu.memory_space<semaphore_mem>>
      tpu.wait_dma2 semaphore(%92 : memref<!tpu.dma_semaphore, #tpu.memory_space<semaphore_mem>>) src(%88 : memref<128xf32, #tpu.memory_space<any>>) dst(%90 : memref<128xf32, #tpu.memory_space<vmem>>)
    } else {
    }
    %c8_i32_32 = arith.constant 8 : i32
    %54 = arith.muli %1, %c8_i32_32 : i32
    %c7_i32 = arith.constant 7 : i32
    %55 = arith.addi %54, %c7_i32 : i32
    %c3_i32_33 = arith.constant 3 : i32
    %56 = arith.cmpi slt, %55, %c3_i32_33 : i32
    %57 = arith.extui %56 : i1 to i32
    %c0_i32_34 = arith.constant 0 : i32
    %58 = arith.cmpi ne, %57, %c0_i32_34 : i32
    scf.if %58 {
      %c8_i32_43 = arith.constant 8 : i32
      %82 = arith.muli %1, %c8_i32_43 : i32
      %c7_i32_44 = arith.constant 7 : i32
      %83 = arith.addi %82, %c7_i32_44 : i32
      %c2_i32_45 = arith.constant 2 : i32
      %84 = arith.minsi %83, %c2_i32_45 : i32
      %85 = arith.index_cast %84 : i32 to index
      %86 = memref.load %arg2[%85] : memref<3xi32, #tpu.memory_space<smem>>
      %c7_i32_46 = arith.constant 7 : i32
      %c7_i32_47 = arith.constant 7 : i32
      %c0_i32_48 = arith.constant 0 : i32
      %87 = tpu.memref_slice %arg3[%86, %c0_i32_48] : memref<24x128xf32, #tpu.memory_space<any>> -> memref<1x128xf32, #tpu.memory_space<any>>
      %88 = tpu.memref_squeeze %87 : memref<1x128xf32, #tpu.memory_space<any>> -> memref<128xf32, #tpu.memory_space<any>>
      %c0_i32_49 = arith.constant 0 : i32
      %89 = tpu.memref_slice %arg5[%11, %c7_i32_46, %c0_i32_49] : memref<2x8x128xf32, #tpu.memory_space<vmem>> -> memref<1x1x128xf32, #tpu.memory_space<vmem>>
      %90 = tpu.memref_squeeze %89 : memref<1x1x128xf32, #tpu.memory_space<vmem>> -> memref<128xf32, #tpu.memory_space<vmem>>
      %91 = tpu.memref_slice %arg6[%11, %c7_i32_47] : memref<2x8x!tpu.dma_semaphore, #tpu.memory_space<semaphore_mem>> -> memref<1x1x!tpu.dma_semaphore, #tpu.memory_space<semaphore_mem>>
      %92 = tpu.memref_squeeze %91 : memref<1x1x!tpu.dma_semaphore, #tpu.memory_space<semaphore_mem>> -> memref<!tpu.dma_semaphore, #tpu.memory_space<semaphore_mem>>
      tpu.wait_dma2 semaphore(%92 : memref<!tpu.dma_semaphore, #tpu.memory_space<semaphore_mem>>) src(%88 : memref<128xf32, #tpu.memory_space<any>>) dst(%90 : memref<128xf32, #tpu.memory_space<vmem>>)
    } else {
    }
    %59 = arith.index_cast %11 : i32 to index
    %c0 = arith.constant 0 : index
    %c0_35 = arith.constant 0 : index
    %60 = vector.load %arg5[%59, %c0, %c0_35] : memref<2x8x128xf32, #tpu.memory_space<vmem>>, vector<1x8x128xf32>
    %61 = vector.shape_cast %60 : vector<1x8x128xf32> to vector<8x128xf32>
    %cst = arith.constant dense<0xFF800000> : vector<8xf32>
    %62 = vector.multi_reduction <maximumf>, %61, %cst [1] : vector<8x128xf32> to vector<8xf32>
    %63 = vector.shape_cast %62 : vector<8xf32> to vector<8x1xf32>
    %64 = vector.broadcast %63 : vector<8x1xf32> to vector<8x128xf32>
    %65 = arith.subf %61, %64 : vector<8x128xf32>
    %66 = math.exp %65 : vector<8x128xf32>
    %cst_36 = arith.constant dense<0.000000e+00> : vector<8xf32>
    %67 = vector.multi_reduction <add>, %66, %cst_36 [1] : vector<8x128xf32> to vector<8xf32>
    %68 = vector.shape_cast %67 : vector<8xf32> to vector<8x1xf32>
    %69 = tpu.iota {dimensions = array<i32: 1>} : vector<8x128xi32>
    %c0_i32_37 = arith.constant 0 : i32
    %70 = vector.broadcast %c0_i32_37 : i32 to vector<8x128xi32>
    %71 = arith.addi %69, %70 : vector<8x128xi32>
    %c3_i32_38 = arith.constant 3 : i32
    %72 = vector.broadcast %c3_i32_38 : i32 to vector<8x128xi32>
    %73 = arith.cmpi eq, %71, %72 : vector<8x128xi32>
    %cst_39 = arith.constant 0.000000e+00 : f32
    %74 = vector.broadcast %cst_39 : f32 to vector<8x128xf32>
    %75 = arith.select %73, %61, %74 : vector<8x128xi1>, vector<8x128xf32>
    %cst_40 = arith.constant dense<0.000000e+00> : vector<8xf32>
    %76 = vector.multi_reduction <add>, %75, %cst_40 [1] : vector<8x128xf32> to vector<8xf32>
    %77 = vector.shape_cast %76 : vector<8xf32> to vector<8x1xf32>
    %78 = arith.subf %77, %63 : vector<8x1xf32>
    %79 = math.exp %78 : vector<8x1xf32>
    %80 = arith.divf %79, %68 : vector<8x1xf32>
    %c0_41 = arith.constant 0 : index
    %c0_42 = arith.constant 0 : index
    %81 = vector.load %arg4[%c0_41, %c0_42] : memref<8x1xf32, #tpu.memory_space<vmem>>, vector<8x1xf32>
    tpu.vector_store %arg4[%c0_41, %c0_42], %80 {strides = array<i32>} : memref<8x1xf32, #tpu.memory_space<vmem>>, vector<8x1xf32>,
    return
  }
  func.func @transform_1(%arg0: i32, %arg1: i32, %arg2: memref<3xi32, #tpu.memory_space<smem>>) -> (i32, i32) {
    %c1_i32 = arith.constant 1 : i32
    %0 = arith.muli %arg0, %c1_i32 : i32
    %1 = arith.addi %0, %arg1 : i32
    %c0_i32 = arith.constant 0 : i32
    %c0_i32_0 = arith.constant 0 : i32
    return %1, %c0_i32 : i32, i32
  }
}

</mosaic_0001>

<llo_original>
// kernel: eos_encouragement_loss.1
$region0: #{eos_encouragement_loss.1}
  #allocation0 [shape = 'u32[]', space=smem, size = 0x4, offset = 0x4, fixed_abs, tag = 'smem constant byte address 0x4 - core index']
  #allocation1 [shape = 'u32[144,128]{1,0:T(1,128)}', space=vmem, size = 0x12000, scoped, tag = 'internal scratch']
  #allocation2 [shape = 'f32[2,8,128]{2,1,0:T(8,128)}', space=vmem, size = 0x2000, scoped, tag = 'scratch operand']
  #allocation3 [shape = 's32[16]{0}', space=sflag, size = 0x40, scoped, tag = 'scratch operand']
  #allocation4 [shape = 's32[1]{0}', space=sflag, size = 0x4, scoped, tag = 'scoped memory for eos_encouragement_loss.1']
  #allocation5 [shape = 'u8[512]{0}', space=smem, size = 0x200, scoped, tag = 'prefetched SMEM operand 0']
  #allocation6 [shape = 's32[]', space=sflag, size = 0x4, offset = 0, fixed_abs, tag = 'sflag constant byte address 0x0 - dummy sync flag']
  #allocation7 [shape = 's32[]', space=sflag, size = 0x4, offset = 0, fixed_abs, tag = 'sflag constant byte address 0x0 - dummy sync flag']
  #allocation8 [shape = 'u32[]', space=smem, size = 0x4, offset = 0x44, fixed_abs, tag = 'smem constant byte address 0x44 - assertion arg 0']
  #allocation9 [shape = 'u32[]', space=smem, size = 0x4, offset = 0x48, fixed_abs, tag = 'smem constant byte address 0x48 - assertion arg 1']
  #allocation10 [shape = 's32[]', space=sflag, size = 0x4, offset = 0, fixed_abs, tag = 'sflag constant byte address 0x0 - dummy sync flag']
  #allocation11 [shape = 's32[]', space=sflag, size = 0x4, offset = 0, fixed_abs, tag = 'sflag constant byte address 0x0 - dummy sync flag']
  #allocation12 [shape = 's32[]', space=sflag, size = 0x4, offset = 0, fixed_abs, tag = 'sflag constant byte address 0x0 - dummy sync flag']
  #allocation13 [shape = 's32[]', space=sflag, size = 0x4, offset = 0, fixed_abs, tag = 'sflag constant byte address 0x0 - dummy sync flag']
  #allocation14 [shape = 's32[]', space=sflag, size = 0x4, offset = 0, fixed_abs, tag = 'sflag constant byte address 0x0 - dummy sync flag']
  #allocation15 [shape = 's32[]', space=sflag, size = 0x4, offset = 0, fixed_abs, tag = 'sflag constant byte address 0x0 - dummy sync flag']
  #allocation16 [shape = 's32[]', space=sflag, size = 0x4, offset = 0, fixed_abs, tag = 'sflag constant byte address 0x0 - dummy sync flag']
  #allocation17 [shape = 's32[]', space=sflag, size = 0x4, offset = 0, fixed_abs, tag = 'sflag constant byte address 0x0 - dummy sync flag']
  #allocation18 [shape = 's32[]', space=sflag, size = 0x4, offset = 0, fixed_abs, tag = 'sflag constant byte address 0x0 - dummy sync flag']
  #allocation19 [shape = 's32[]', space=sflag, size = 0x4, offset = 0, fixed_abs, tag = 'sflag constant byte address 0x0 - dummy sync flag']
  #allocation20 [shape = 's32[]', space=sflag, size = 0x4, offset = 0, fixed_abs, tag = 'sflag constant byte address 0x0 - dummy sync flag']
  #allocation21 [shape = 's32[]', space=sflag, size = 0x4, offset = 0, fixed_abs, tag = 'sflag constant byte address 0x0 - dummy sync flag']
  #allocation22 [shape = 's32[]', space=sflag, size = 0x4, offset = 0, fixed_abs, tag = 'sflag constant byte address 0x0 - dummy sync flag']
  #allocation23 [shape = 's32[]', space=sflag, size = 0x4, offset = 0, fixed_abs, tag = 'sflag constant byte address 0x0 - dummy sync flag']
  #allocation24 [shape = 's32[]', space=sflag, size = 0x4, offset = 0, fixed_abs, tag = 'sflag constant byte address 0x0 - dummy sync flag']
  #allocation25 [shape = 's32[]', space=sflag, size = 0x4, offset = 0, fixed_abs, tag = 'sflag constant byte address 0x0 - dummy sync flag']
  #allocation26 [shape = 's32[]', space=sflag, size = 0x4, offset = 0, fixed_abs, tag = 'sflag constant byte address 0x0 - dummy sync flag']
  #allocation27 [shape = 's32[]', space=sflag, size = 0x4, offset = 0, fixed_abs, tag = 'sflag constant byte address 0x0 - dummy sync flag']
  #allocation28 [shape = 's32[]', space=sflag, size = 0x4, offset = 0, fixed_abs, tag = 'sflag constant byte address 0x0 - dummy sync flag']
  #allocation29 [shape = 's32[]', space=sflag, size = 0x4, offset = 0, fixed_abs, tag = 'sflag constant byte address 0x0 - dummy sync flag']
  #allocation30 [shape = 's32[]', space=sflag, size = 0x4, offset = 0, fixed_abs, tag = 'sflag constant byte address 0x0 - dummy sync flag']
  #allocation31 [shape = 's32[]', space=sflag, size = 0x4, offset = 0, fixed_abs, tag = 'sflag constant byte address 0x0 - dummy sync flag']
  #allocation32 [shape = 's32[]', space=sflag, size = 0x4, offset = 0, fixed_abs, tag = 'sflag constant byte address 0x0 - dummy sync flag']
  #allocation33 [shape = 's32[]', space=sflag, size = 0x4, offset = 0, fixed_abs, tag = 'sflag constant byte address 0x0 - dummy sync flag']
  #allocation34 [shape = 's32[]', space=sflag, size = 0x4, offset = 0, fixed_abs, tag = 'sflag constant byte address 0x0 - dummy sync flag']
  #allocation35 [shape = 's32[]', space=sflag, size = 0x4, offset = 0, fixed_abs, tag = 'sflag constant byte address 0x0 - dummy sync flag']
  #allocation36 [shape = 's32[]', space=sflag, size = 0x4, offset = 0, fixed_abs, tag = 'sflag constant byte address 0x0 - dummy sync flag']
  #allocation37 [shape = 's32[]', space=sflag, size = 0x4, offset = 0, fixed_abs, tag = 'sflag constant byte address 0x0 - dummy sync flag']
  #allocation38 [shape = 's32[]', space=sflag, size = 0x4, offset = 0, fixed_abs, tag = 'sflag constant byte address 0x0 - dummy sync flag']
  #allocation39 [shape = 's32[]', space=sflag, size = 0x4, offset = 0, fixed_abs, tag = 'sflag constant byte address 0x0 - dummy sync flag']
  %s0 = inlined_call_operand.vmem [shape: s32[3], index: 0, kind: input, shape index: {}]
  %s1 = inlined_call_operand.hbm [shape: f32[24,128], index: 1, kind: input, shape index: {}]
  %s2 = inlined_call_operand.vmem [shape: f32[8,1], index: 2, kind: output, shape index: {}]
  %s3 = sld [smem:[#allocation0]]
  $region178: #{eos_encouragement_loss.1} parent=0
    _
  %s5 = ssub.s32 1, %s3
  %s6 = scalar_select 0, %s5, %s3
  %s7 = sshll.u32 %s0, 4
  %s8 = int_to_ptr.vmem [resolvable:$true] %s7
  %10 = dma.vmem_to_smem %s8, 16, [#allocation5], [#allocation4]
  %11 = dma.done [#allocation4], 16
  %12 = sfence
  %s13 = sadd.s32 0, 0
  %p14 = scmp.lt.s32.totalorder %s13, 0
  %s15 = scalar_select %p14, %s13, 0
  %s16 = smul.addr %s15, 8
  %s17 = scalar_lea.vmem %s2, %s16
  %s18 = sadd.s32 0, 0
  %p19 = scmp.lt.s32.totalorder %s18, 0
  %s20 = scalar_select %p19, %s18, 0
  %s21 = smul.addr %s20, 8
  %s22 = scalar_lea.vmem %s2, %s21
  %s23 = sadd.s32 0, 0
  %s24 = sadd.s32 0, 0
  %s25 = ssub.s32 0, 0
  %s26 = ssub.s32 0, 0
  %p27 = scmp.ne.s32.totalorder 0, 0
  %p28 = scmp.lt.s32.totalorder 0, 0
  %p29 = pnand %p28, %p27
  %p30 = pneg %p29
  %s31 = sadd.s32 0, 2
  %s32 = scalar_select %p30, %s31, 0
  %p33 = scmp.eq.s32.totalorder 0, 0
  // Predicated region
  $region2: #{eos_encouragement_loss.1} parent=0 // pred_check
    %p34 = pneg %p33
  $region3: #{eos_encouragement_loss.1} parent=0 // pred_check_branch
    %36 = sbr.rel (%p34) target = $region5
  $region4: #{eos_encouragement_loss.1} parent=0 // pred_region
    %s37 = smul.u32 %s24, 8
    %p38 = scmp.lt.s32.totalorder %s37, 3
    // Predicated region
    $region6: #{eos_encouragement_loss.1} parent=4 // pred_check
      %p39 = pneg %p38
    $region7: #{eos_encouragement_loss.1} parent=4 // pred_check_branch
      %41 = sbr.rel (%p39) target = $region9
    $region8: #{eos_encouragement_loss.1} parent=4 // pred_region
      %p42 = scmp.lt.s32.totalorder %s37, 2
      %s43 = scalar_select %p42, %s37, 2
      %s44 = sld [smem:[#allocation5 + %s43]]
      %s45 = smul.addr %s44, 16
      %s46 = scalar_lea.hbm %s1, %s45
      %s47 = smul.u32 %s32, 8
      %s48 = scalar_lea.vmem [#allocation2], %s47
      %s49 = scalar_lea.sflag [#allocation3], %s47
      // Predicated region
      $region10: #{eos_encouragement_loss.1} parent=8 // pred_check
        _
      $region11: #{eos_encouragement_loss.1} parent=8 // pred_check_branch
        %51 = sbr.rel target = $region13
      $region12: #{eos_encouragement_loss.1} parent=8 // pred_region
        %52 = sst [smem:[#allocation8]] [#allocation7]
        %53 = sst [smem:[#allocation9]] [#allocation6]
      $region13: #{eos_encouragement_loss.1} parent=8 // pred_fallthru
        _
      %55 = shalt.err (0)
      %s57 = sshll.u32 %s48, 4
      %s58 = int_to_ptr.vmem [resolvable:$true] %s57
      %60 = dma.hbm_to_vmem [thread:$0]  %s46, 16, %s58, %s49
    $region9: #{eos_encouragement_loss.1} parent=4 // pred_fallthru
      _
    %s61 = sadd.s32 %s37, 1
    %p62 = scmp.lt.s32.totalorder %s61, 3
    // Predicated region
    $region14: #{eos_encouragement_loss.1} parent=4 // pred_check
      %p63 = pneg %p62
    $region15: #{eos_encouragement_loss.1} parent=4 // pred_check_branch
      %65 = sbr.rel (%p63) target = $region17
    $region16: #{eos_encouragement_loss.1} parent=4 // pred_region
      %p66 = scmp.lt.s32.totalorder %s61, 2
      %s67 = scalar_select %p66, %s61, 2
      %s68 = sld [smem:[#allocation5 + %s67]]
      %s69 = smul.addr %s68, 16
      %s70 = scalar_lea.hbm %s1, %s69
      %s71 = smul.u32 %s32, 8
      %s72 = sadd.s32 1, %s71
      %s73 = scalar_lea.vmem [#allocation2], %s72
      %s74 = scalar_lea.sflag [#allocation3], %s72
      // Predicated region
      $region18: #{eos_encouragement_loss.1} parent=16 // pred_check
        _
      $region19: #{eos_encouragement_loss.1} parent=16 // pred_check_branch
        %76 = sbr.rel target = $region21
      $region20: #{eos_encouragement_loss.1} parent=16 // pred_region
        %77 = sst [smem:[#allocation8]] [#allocation11]
        %78 = sst [smem:[#allocation9]] [#allocation10]
      $region21: #{eos_encouragement_loss.1} parent=16 // pred_fallthru
        _
      %80 = shalt.err (0)
      %s82 = sshll.u32 %s73, 4
      %s83 = int_to_ptr.vmem [resolvable:$true] %s82
      %85 = dma.hbm_to_vmem [thread:$0]  %s70, 16, %s83, %s74
    $region17: #{eos_encouragement_loss.1} parent=4 // pred_fallthru
      _
    %s86 = sadd.s32 %s37, 2
    %p87 = scmp.lt.s32.totalorder %s86, 3
    // Predicated region
    $region22: #{eos_encouragement_loss.1} parent=4 // pred_check
      %p88 = pneg %p87
    $region23: #{eos_encouragement_loss.1} parent=4 // pred_check_branch
      %90 = sbr.rel (%p88) target = $region25
    $region24: #{eos_encouragement_loss.1} parent=4 // pred_region
      %p91 = scmp.lt.s32.totalorder %s86, 2
      %s92 = scalar_select %p91, %s86, 2
      %s93 = sld [smem:[#allocation5 + %s92]]
      %s94 = smul.addr %s93, 16
      %s95 = scalar_lea.hbm %s1, %s94
      %s96 = smul.u32 %s32, 8
      %s97 = sadd.s32 2, %s96
      %s98 = scalar_lea.vmem [#allocation2], %s97
      %s99 = scalar_lea.sflag [#allocation3], %s97
      // Predicated region
      $region26: #{eos_encouragement_loss.1} parent=24 // pred_check
        _
      $region27: #{eos_encouragement_loss.1} parent=24 // pred_check_branch
        %101 = sbr.rel target = $region29
      $region28: #{eos_encouragement_loss.1} parent=24 // pred_region
        %102 = sst [smem:[#allocation8]] [#allocation13]
        %103 = sst [smem:[#allocation9]] [#allocation12]
      $region29: #{eos_encouragement_loss.1} parent=24 // pred_fallthru
        _
      %105 = shalt.err (0)
      %s107 = sshll.u32 %s98, 4
      %s108 = int_to_ptr.vmem [resolvable:$true] %s107
      %110 = dma.hbm_to_vmem [thread:$0]  %s95, 16, %s108, %s99
    $region25: #{eos_encouragement_loss.1} parent=4 // pred_fallthru
      _
    %s111 = sadd.s32 %s37, 3
    %p112 = scmp.lt.s32.totalorder %s111, 3
    // Predicated region
    $region30: #{eos_encouragement_loss.1} parent=4 // pred_check
      %p113 = pneg %p112
    $region31: #{eos_encouragement_loss.1} parent=4 // pred_check_branch
      %115 = sbr.rel (%p113) target = $region33
    $region32: #{eos_encouragement_loss.1} parent=4 // pred_region
      %p116 = scmp.lt.s32.totalorder %s111, 2
      %s117 = scalar_select %p116, %s111, 2
      %s118 = sld [smem:[#allocation5 + %s117]]
      %s119 = smul.addr %s118, 16
      %s120 = scalar_lea.hbm %s1, %s119
      %s121 = smul.u32 %s32, 8
      %s122 = sadd.s32 3, %s121
      %s123 = scalar_lea.vmem [#allocation2], %s122
      %s124 = scalar_lea.sflag [#allocation3], %s122
      // Predicated region
      $region34: #{eos_encouragement_loss.1} parent=32 // pred_check
        _
      $region35: #{eos_encouragement_loss.1} parent=32 // pred_check_branch
        %126 = sbr.rel target = $region37
      $region36: #{eos_encouragement_loss.1} parent=32 // pred_region
        %127 = sst [smem:[#allocation8]] [#allocation15]
        %128 = sst [smem:[#allocation9]] [#allocation14]
      $region37: #{eos_encouragement_loss.1} parent=32 // pred_fallthru
        _
      %130 = shalt.err (0)
      %s132 = sshll.u32 %s123, 4
      %s133 = int_to_ptr.vmem [resolvable:$true] %s132
      %135 = dma.hbm_to_vmem [thread:$0]  %s120, 16, %s133, %s124
    $region33: #{eos_encouragement_loss.1} parent=4 // pred_fallthru
      _
    %s136 = sadd.s32 %s37, 4
    %p137 = scmp.lt.s32.totalorder %s136, 3
    // Predicated region
    $region38: #{eos_encouragement_loss.1} parent=4 // pred_check
      %p138 = pneg %p137
    $region39: #{eos_encouragement_loss.1} parent=4 // pred_check_branch
      %140 = sbr.rel (%p138) target = $region41
    $region40: #{eos_encouragement_loss.1} parent=4 // pred_region
      %p141 = scmp.lt.s32.totalorder %s136, 2
      %s142 = scalar_select %p141, %s136, 2
      %s143 = sld [smem:[#allocation5 + %s142]]
      %s144 = smul.addr %s143, 16
      %s145 = scalar_lea.hbm %s1, %s144
      %s146 = smul.u32 %s32, 8
      %s147 = sadd.s32 4, %s146
      %s148 = scalar_lea.vmem [#allocation2], %s147
      %s149 = scalar_lea.sflag [#allocation3], %s147
      // Predicated region
      $region42: #{eos_encouragement_loss.1} parent=40 // pred_check
        _
      $region43: #{eos_encouragement_loss.1} parent=40 // pred_check_branch
        %151 = sbr.rel target = $region45
      $region44: #{eos_encouragement_loss.1} parent=40 // pred_region
        %152 = sst [smem:[#allocation8]] [#allocation17]
        %153 = sst [smem:[#allocation9]] [#allocation16]
      $region45: #{eos_encouragement_loss.1} parent=40 // pred_fallthru
        _
      %155 = shalt.err (0)
      %s157 = sshll.u32 %s148, 4
      %s158 = int_to_ptr.vmem [resolvable:$true] %s157
      %160 = dma.hbm_to_vmem [thread:$0]  %s145, 16, %s158, %s149
    $region41: #{eos_encouragement_loss.1} parent=4 // pred_fallthru
      _
    %s161 = sadd.s32 %s37, 5
    %p162 = scmp.lt.s32.totalorder %s161, 3
    // Predicated region
    $region46: #{eos_encouragement_loss.1} parent=4 // pred_check
      %p163 = pneg %p162
    $region47: #{eos_encouragement_loss.1} parent=4 // pred_check_branch
      %165 = sbr.rel (%p163) target = $region49
    $region48: #{eos_encouragement_loss.1} parent=4 // pred_region
      %p166 = scmp.lt.s32.totalorder %s161, 2
      %s167 = scalar_select %p166, %s161, 2
      %s168 = sld [smem:[#allocation5 + %s167]]
      %s169 = smul.addr %s168, 16
      %s170 = scalar_lea.hbm %s1, %s169
      %s171 = smul.u32 %s32, 8
      %s172 = sadd.s32 5, %s171
      %s173 = scalar_lea.vmem [#allocation2], %s172
      %s174 = scalar_lea.sflag [#allocation3], %s172
      // Predicated region
      $region50: #{eos_encouragement_loss.1} parent=48 // pred_check
        _
      $region51: #{eos_encouragement_loss.1} parent=48 // pred_check_branch
        %176 = sbr.rel target = $region53
      $region52: #{eos_encouragement_loss.1} parent=48 // pred_region
        %177 = sst [smem:[#allocation8]] [#allocation19]
        %178 = sst [smem:[#allocation9]] [#allocation18]
      $region53: #{eos_encouragement_loss.1} parent=48 // pred_fallthru
        _
      %180 = shalt.err (0)
      %s182 = sshll.u32 %s173, 4
      %s183 = int_to_ptr.vmem [resolvable:$true] %s182
      %185 = dma.hbm_to_vmem [thread:$0]  %s170, 16, %s183, %s174
    $region49: #{eos_encouragement_loss.1} parent=4 // pred_fallthru
      _
    %s186 = sadd.s32 %s37, 6
    %p187 = scmp.lt.s32.totalorder %s186, 3
    // Predicated region
    $region54: #{eos_encouragement_loss.1} parent=4 // pred_check
      %p188 = pneg %p187
    $region55: #{eos_encouragement_loss.1} parent=4 // pred_check_branch
      %190 = sbr.rel (%p188) target = $region57
    $region56: #{eos_encouragement_loss.1} parent=4 // pred_region
      %p191 = scmp.lt.s32.totalorder %s186, 2
      %s192 = scalar_select %p191, %s186, 2
      %s193 = sld [smem:[#allocation5 + %s192]]
      %s194 = smul.addr %s193, 16
      %s195 = scalar_lea.hbm %s1, %s194
      %s196 = smul.u32 %s32, 8
      %s197 = sadd.s32 6, %s196
      %s198 = scalar_lea.vmem [#allocation2], %s197
      %s199 = scalar_lea.sflag [#allocation3], %s197
      // Predicated region
      $region58: #{eos_encouragement_loss.1} parent=56 // pred_check
        _
      $region59: #{eos_encouragement_loss.1} parent=56 // pred_check_branch
        %201 = sbr.rel target = $region61
      $region60: #{eos_encouragement_loss.1} parent=56 // pred_region
        %202 = sst [smem:[#allocation8]] [#allocation21]
        %203 = sst [smem:[#allocation9]] [#allocation20]
      $region61: #{eos_encouragement_loss.1} parent=56 // pred_fallthru
        _
      %205 = shalt.err (0)
      %s207 = sshll.u32 %s198, 4
      %s208 = int_to_ptr.vmem [resolvable:$true] %s207
      %210 = dma.hbm_to_vmem [thread:$0]  %s195, 16, %s208, %s199
    $region57: #{eos_encouragement_loss.1} parent=4 // pred_fallthru
      _
    %s211 = sadd.s32 %s37, 7
    %p212 = scmp.lt.s32.totalorder %s211, 3
    // Predicated region
    $region62: #{eos_encouragement_loss.1} parent=4 // pred_check
      %p213 = pneg %p212
    $region63: #{eos_encouragement_loss.1} parent=4 // pred_check_branch
      %215 = sbr.rel (%p213) target = $region65
    $region64: #{eos_encouragement_loss.1} parent=4 // pred_region
      %p216 = scmp.lt.s32.totalorder %s211, 2
      %s217 = scalar_select %p216, %s211, 2
      %s218 = sld [smem:[#allocation5 + %s217]]
      %s219 = smul.addr %s218, 16
      %s220 = scalar_lea.hbm %s1, %s219
      %s221 = smul.u32 %s32, 8
      %s222 = sadd.s32 7, %s221
      %s223 = scalar_lea.vmem [#allocation2], %s222
      %s224 = scalar_lea.sflag [#allocation3], %s222
      // Predicated region
      $region66: #{eos_encouragement_loss.1} parent=64 // pred_check
        _
      $region67: #{eos_encouragement_loss.1} parent=64 // pred_check_branch
        %226 = sbr.rel target = $region69
      $region68: #{eos_encouragement_loss.1} parent=64 // pred_region
        %227 = sst [smem:[#allocation8]] [#allocation23]
        %228 = sst [smem:[#allocation9]] [#allocation22]
      $region69: #{eos_encouragement_loss.1} parent=64 // pred_fallthru
        _
      %230 = shalt.err (0)
      %s232 = sshll.u32 %s223, 4
      %s233 = int_to_ptr.vmem [resolvable:$true] %s232
      %235 = dma.hbm_to_vmem [thread:$0]  %s220, 16, %s233, %s224
    $region65: #{eos_encouragement_loss.1} parent=4 // pred_fallthru
      _
  $region5: #{eos_encouragement_loss.1} parent=0 // pred_fallthru
    _
  %s236 = sadd.s32 0, 1
  %p237 = scmp.lt.s32.totalorder %s236, 1
  // Predicated region
  $region70: #{eos_encouragement_loss.1} parent=0 // pred_check
    %p238 = pneg %p237
  $region71: #{eos_encouragement_loss.1} parent=0 // pred_check_branch
    %240 = sbr.rel (%p238) target = $region73
  $region72: #{eos_encouragement_loss.1} parent=0 // pred_region
    %s241 = sadd.s32 %s24, 1
    %s242 = ssub.s32 1, %s32
    %s243 = smul.u32 %s241, 8
    %p244 = scmp.lt.s32.totalorder %s243, 3
    // Predicated region
    $region74: #{eos_encouragement_loss.1} parent=72 // pred_check
      %p245 = pneg %p244
    $region75: #{eos_encouragement_loss.1} parent=72 // pred_check_branch
      %247 = sbr.rel (%p245) target = $region77
    $region76: #{eos_encouragement_loss.1} parent=72 // pred_region
      %p248 = scmp.lt.s32.totalorder %s243, 2
      %s249 = scalar_select %p248, %s243, 2
      %s250 = sld [smem:[#allocation5 + %s249]]
      %s251 = smul.addr %s250, 16
      %s252 = scalar_lea.hbm %s1, %s251
      %s253 = smul.u32 %s242, 8
      %s254 = scalar_lea.vmem [#allocation2], %s253
      %s255 = scalar_lea.sflag [#allocation3], %s253
      // Predicated region
      $region78: #{eos_encouragement_loss.1} parent=76 // pred_check
        _
      $region79: #{eos_encouragement_loss.1} parent=76 // pred_check_branch
        %257 = sbr.rel target = $region81
      $region80: #{eos_encouragement_loss.1} parent=76 // pred_region
        %258 = sst [smem:[#allocation8]] [#allocation25]
        %259 = sst [smem:[#allocation9]] [#allocation24]
      $region81: #{eos_encouragement_loss.1} parent=76 // pred_fallthru
        _
      %261 = shalt.err (0)
      %s263 = sshll.u32 %s254, 4
      %s264 = int_to_ptr.vmem [resolvable:$true] %s263
      %266 = dma.hbm_to_vmem [thread:$0]  %s252, 16, %s264, %s255
    $region77: #{eos_encouragement_loss.1} parent=72 // pred_fallthru
      _
    %s267 = sadd.s32 %s243, 1
    %p268 = scmp.lt.s32.totalorder %s267, 3
    // Predicated region
    $region82: #{eos_encouragement_loss.1} parent=72 // pred_check
      %p269 = pneg %p268
    $region83: #{eos_encouragement_loss.1} parent=72 // pred_check_branch
      %271 = sbr.rel (%p269) target = $region85
    $region84: #{eos_encouragement_loss.1} parent=72 // pred_region
      %p272 = scmp.lt.s32.totalorder %s267, 2
      %s273 = scalar_select %p272, %s267, 2
      %s274 = sld [smem:[#allocation5 + %s273]]
      %s275 = smul.addr %s274, 16
      %s276 = scalar_lea.hbm %s1, %s275
      %s277 = smul.u32 %s242, 8
      %s278 = sadd.s32 1, %s277
      %s279 = scalar_lea.vmem [#allocation2], %s278
      %s280 = scalar_lea.sflag [#allocation3], %s278
      // Predicated region
      $region86: #{eos_encouragement_loss.1} parent=84 // pred_check
        _
      $region87: #{eos_encouragement_loss.1} parent=84 // pred_check_branch
        %282 = sbr.rel target = $region89
      $region88: #{eos_encouragement_loss.1} parent=84 // pred_region
        %283 = sst [smem:[#allocation8]] [#allocation27]
        %284 = sst [smem:[#allocation9]] [#allocation26]
      $region89: #{eos_encouragement_loss.1} parent=84 // pred_fallthru
        _
      %286 = shalt.err (0)
      %s288 = sshll.u32 %s279, 4
      %s289 = int_to_ptr.vmem [resolvable:$true] %s288
      %291 = dma.hbm_to_vmem [thread:$0]  %s276, 16, %s289, %s280
    $region85: #{eos_encouragement_loss.1} parent=72 // pred_fallthru
      _
    %s292 = sadd.s32 %s243, 2
    %p293 = scmp.lt.s32.totalorder %s292, 3
    // Predicated region
    $region90: #{eos_encouragement_loss.1} parent=72 // pred_check
      %p294 = pneg %p293
    $region91: #{eos_encouragement_loss.1} parent=72 // pred_check_branch
      %296 = sbr.rel (%p294) target = $region93
    $region92: #{eos_encouragement_loss.1} parent=72 // pred_region
      %p297 = scmp.lt.s32.totalorder %s292, 2
      %s298 = scalar_select %p297, %s292, 2
      %s299 = sld [smem:[#allocation5 + %s298]]
      %s300 = smul.addr %s299, 16
      %s301 = scalar_lea.hbm %s1, %s300
      %s302 = smul.u32 %s242, 8
      %s303 = sadd.s32 2, %s302
      %s304 = scalar_lea.vmem [#allocation2], %s303
      %s305 = scalar_lea.sflag [#allocation3], %s303
      // Predicated region
      $region94: #{eos_encouragement_loss.1} parent=92 // pred_check
        _
      $region95: #{eos_encouragement_loss.1} parent=92 // pred_check_branch
        %307 = sbr.rel target = $region97
      $region96: #{eos_encouragement_loss.1} parent=92 // pred_region
        %308 = sst [smem:[#allocation8]] [#allocation29]
        %309 = sst [smem:[#allocation9]] [#allocation28]
      $region97: #{eos_encouragement_loss.1} parent=92 // pred_fallthru
        _
      %311 = shalt.err (0)
      %s313 = sshll.u32 %s304, 4
      %s314 = int_to_ptr.vmem [resolvable:$true] %s313
      %316 = dma.hbm_to_vmem [thread:$0]  %s301, 16, %s314, %s305
    $region93: #{eos_encouragement_loss.1} parent=72 // pred_fallthru
      _
    %s317 = sadd.s32 %s243, 3
    %p318 = scmp.lt.s32.totalorder %s317, 3
    // Predicated region
    $region98: #{eos_encouragement_loss.1} parent=72 // pred_check
      %p319 = pneg %p318
    $region99: #{eos_encouragement_loss.1} parent=72 // pred_check_branch
      %321 = sbr.rel (%p319) target = $region101
    $region100: #{eos_encouragement_loss.1} parent=72 // pred_region
      %p322 = scmp.lt.s32.totalorder %s317, 2
      %s323 = scalar_select %p322, %s317, 2
      %s324 = sld [smem:[#allocation5 + %s323]]
      %s325 = smul.addr %s324, 16
      %s326 = scalar_lea.hbm %s1, %s325
      %s327 = smul.u32 %s242, 8
      %s328 = sadd.s32 3, %s327
      %s329 = scalar_lea.vmem [#allocation2], %s328
      %s330 = scalar_lea.sflag [#allocation3], %s328
      // Predicated region
      $region102: #{eos_encouragement_loss.1} parent=100 // pred_check
        _
      $region103: #{eos_encouragement_loss.1} parent=100 // pred_check_branch
        %332 = sbr.rel target = $region105
      $region104: #{eos_encouragement_loss.1} parent=100 // pred_region
        %333 = sst [smem:[#allocation8]] [#allocation31]
        %334 = sst [smem:[#allocation9]] [#allocation30]
      $region105: #{eos_encouragement_loss.1} parent=100 // pred_fallthru
        _
      %336 = shalt.err (0)
      %s338 = sshll.u32 %s329, 4
      %s339 = int_to_ptr.vmem [resolvable:$true] %s338
      %341 = dma.hbm_to_vmem [thread:$0]  %s326, 16, %s339, %s330
    $region101: #{eos_encouragement_loss.1} parent=72 // pred_fallthru
      _
    %s342 = sadd.s32 %s243, 4
    %p343 = scmp.lt.s32.totalorder %s342, 3
    // Predicated region
    $region106: #{eos_encouragement_loss.1} parent=72 // pred_check
      %p344 = pneg %p343
    $region107: #{eos_encouragement_loss.1} parent=72 // pred_check_branch
      %346 = sbr.rel (%p344) target = $region109
    $region108: #{eos_encouragement_loss.1} parent=72 // pred_region
      %p347 = scmp.lt.s32.totalorder %s342, 2
      %s348 = scalar_select %p347, %s342, 2
      %s349 = sld [smem:[#allocation5 + %s348]]
      %s350 = smul.addr %s349, 16
      %s351 = scalar_lea.hbm %s1, %s350
      %s352 = smul.u32 %s242, 8
      %s353 = sadd.s32 4, %s352
      %s354 = scalar_lea.vmem [#allocation2], %s353
      %s355 = scalar_lea.sflag [#allocation3], %s353
      // Predicated region
      $region110: #{eos_encouragement_loss.1} parent=108 // pred_check
        _
      $region111: #{eos_encouragement_loss.1} parent=108 // pred_check_branch
        %357 = sbr.rel target = $region113
      $region112: #{eos_encouragement_loss.1} parent=108 // pred_region
        %358 = sst [smem:[#allocation8]] [#allocation33]
        %359 = sst [smem:[#allocation9]] [#allocation32]
      $region113: #{eos_encouragement_loss.1} parent=108 // pred_fallthru
        _
      %361 = shalt.err (0)
      %s363 = sshll.u32 %s354, 4
      %s364 = int_to_ptr.vmem [resolvable:$true] %s363
      %366 = dma.hbm_to_vmem [thread:$0]  %s351, 16, %s364, %s355
    $region109: #{eos_encouragement_loss.1} parent=72 // pred_fallthru
      _
    %s367 = sadd.s32 %s243, 5
    %p368 = scmp.lt.s32.totalorder %s367, 3
    // Predicated region
    $region114: #{eos_encouragement_loss.1} parent=72 // pred_check
      %p369 = pneg %p368
    $region115: #{eos_encouragement_loss.1} parent=72 // pred_check_branch
      %371 = sbr.rel (%p369) target = $region117
    $region116: #{eos_encouragement_loss.1} parent=72 // pred_region
      %p372 = scmp.lt.s32.totalorder %s367, 2
      %s373 = scalar_select %p372, %s367, 2
      %s374 = sld [smem:[#allocation5 + %s373]]
      %s375 = smul.addr %s374, 16
      %s376 = scalar_lea.hbm %s1, %s375
      %s377 = smul.u32 %s242, 8
      %s378 = sadd.s32 5, %s377
      %s379 = scalar_lea.vmem [#allocation2], %s378
      %s380 = scalar_lea.sflag [#allocation3], %s378
      // Predicated region
      $region118: #{eos_encouragement_loss.1} parent=116 // pred_check
        _
      $region119: #{eos_encouragement_loss.1} parent=116 // pred_check_branch
        %382 = sbr.rel target = $region121
      $region120: #{eos_encouragement_loss.1} parent=116 // pred_region
        %383 = sst [smem:[#allocation8]] [#allocation35]
        %384 = sst [smem:[#allocation9]] [#allocation34]
      $region121: #{eos_encouragement_loss.1} parent=116 // pred_fallthru
        _
      %386 = shalt.err (0)
      %s388 = sshll.u32 %s379, 4
      %s389 = int_to_ptr.vmem [resolvable:$true] %s388
      %391 = dma.hbm_to_vmem [thread:$0]  %s376, 16, %s389, %s380
    $region117: #{eos_encouragement_loss.1} parent=72 // pred_fallthru
      _
    %s392 = sadd.s32 %s243, 6
    %p393 = scmp.lt.s32.totalorder %s392, 3
    // Predicated region
    $region122: #{eos_encouragement_loss.1} parent=72 // pred_check
      %p394 = pneg %p393
    $region123: #{eos_encouragement_loss.1} parent=72 // pred_check_branch
      %396 = sbr.rel (%p394) target = $region125
    $region124: #{eos_encouragement_loss.1} parent=72 // pred_region
      %p397 = scmp.lt.s32.totalorder %s392, 2
      %s398 = scalar_select %p397, %s392, 2
      %s399 = sld [smem:[#allocation5 + %s398]]
      %s400 = smul.addr %s399, 16
      %s401 = scalar_lea.hbm %s1, %s400
      %s402 = smul.u32 %s242, 8
      %s403 = sadd.s32 6, %s402
      %s404 = scalar_lea.vmem [#allocation2], %s403
      %s405 = scalar_lea.sflag [#allocation3], %s403
      // Predicated region
      $region126: #{eos_encouragement_loss.1} parent=124 // pred_check
        _
      $region127: #{eos_encouragement_loss.1} parent=124 // pred_check_branch
        %407 = sbr.rel target = $region129
      $region128: #{eos_encouragement_loss.1} parent=124 // pred_region
        %408 = sst [smem:[#allocation8]] [#allocation37]
        %409 = sst [smem:[#allocation9]] [#allocation36]
      $region129: #{eos_encouragement_loss.1} parent=124 // pred_fallthru
        _
      %411 = shalt.err (0)
      %s413 = sshll.u32 %s404, 4
      %s414 = int_to_ptr.vmem [resolvable:$true] %s413
      %416 = dma.hbm_to_vmem [thread:$0]  %s401, 16, %s414, %s405
    $region125: #{eos_encouragement_loss.1} parent=72 // pred_fallthru
      _
    %s417 = sadd.s32 %s243, 7
    %p418 = scmp.lt.s32.totalorder %s417, 3
    // Predicated region
    $region130: #{eos_encouragement_loss.1} parent=72 // pred_check
      %p419 = pneg %p418
    $region131: #{eos_encouragement_loss.1} parent=72 // pred_check_branch
      %421 = sbr.rel (%p419) target = $region133
    $region132: #{eos_encouragement_loss.1} parent=72 // pred_region
      %p422 = scmp.lt.s32.totalorder %s417, 2
      %s423 = scalar_select %p422, %s417, 2
      %s424 = sld [smem:[#allocation5 + %s423]]
      %s425 = smul.addr %s424, 16
      %s426 = scalar_lea.hbm %s1, %s425
      %s427 = smul.u32 %s242, 8
      %s428 = sadd.s32 7, %s427
      %s429 = scalar_lea.vmem [#allocation2], %s428
      %s430 = scalar_lea.sflag [#allocation3], %s428
      // Predicated region
      $region134: #{eos_encouragement_loss.1} parent=132 // pred_check
        _
      $region135: #{eos_encouragement_loss.1} parent=132 // pred_check_branch
        %432 = sbr.rel target = $region137
      $region136: #{eos_encouragement_loss.1} parent=132 // pred_region
        %433 = sst [smem:[#allocation8]] [#allocation39]
        %434 = sst [smem:[#allocation9]] [#allocation38]
      $region137: #{eos_encouragement_loss.1} parent=132 // pred_fallthru
        _
      %436 = shalt.err (0)
      %s438 = sshll.u32 %s429, 4
      %s439 = int_to_ptr.vmem [resolvable:$true] %s438
      %441 = dma.hbm_to_vmem [thread:$0]  %s426, 16, %s439, %s430
    $region133: #{eos_encouragement_loss.1} parent=72 // pred_fallthru
      _
  $region73: #{eos_encouragement_loss.1} parent=0 // pred_fallthru
    _
  %s442 = smul.u32 %s24, 8
  %p443 = scmp.lt.s32.totalorder %s442, 3
  // Predicated region
  $region138: #{eos_encouragement_loss.1} parent=0 // pred_check
    %p444 = pneg %p443
  $region139: #{eos_encouragement_loss.1} parent=0 // pred_check_branch
    %446 = sbr.rel (%p444) target = $region141
  $region140: #{eos_encouragement_loss.1} parent=0 // pred_region
    %p447 = scmp.lt.s32.totalorder %s442, 2
    %s448 = scalar_select %p447, %s442, 2
    %s449 = sld [smem:[#allocation5 + %s448]]
    %s450 = smul.u32 %s32, 8
    %s451 = scalar_lea.sflag [#allocation3], %s450
    %453 = dma.done %s451, 16
  $region141: #{eos_encouragement_loss.1} parent=0 // pred_fallthru
    _
  %s454 = sadd.s32 %s442, 1
  %p455 = scmp.lt.s32.totalorder %s454, 3
  // Predicated region
  $region142: #{eos_encouragement_loss.1} parent=0 // pred_check
    %p456 = pneg %p455
  $region143: #{eos_encouragement_loss.1} parent=0 // pred_check_branch
    %458 = sbr.rel (%p456) target = $region145
  $region144: #{eos_encouragement_loss.1} parent=0 // pred_region
    %p459 = scmp.lt.s32.totalorder %s454, 2
    %s460 = scalar_select %p459, %s454, 2
    %s461 = sld [smem:[#allocation5 + %s460]]
    %s462 = smul.u32 %s32, 8
    %s463 = sadd.s32 1, %s462
    %s464 = scalar_lea.sflag [#allocation3], %s463
    %466 = dma.done %s464, 16
  $region145: #{eos_encouragement_loss.1} parent=0 // pred_fallthru
    _
  %s467 = sadd.s32 %s442, 2
  %p468 = scmp.lt.s32.totalorder %s467, 3
  // Predicated region
  $region146: #{eos_encouragement_loss.1} parent=0 // pred_check
    %p469 = pneg %p468
  $region147: #{eos_encouragement_loss.1} parent=0 // pred_check_branch
    %471 = sbr.rel (%p469) target = $region149
  $region148: #{eos_encouragement_loss.1} parent=0 // pred_region
    %p472 = scmp.lt.s32.totalorder %s467, 2
    %s473 = scalar_select %p472, %s467, 2
    %s474 = sld [smem:[#allocation5 + %s473]]
    %s475 = smul.u32 %s32, 8
    %s476 = sadd.s32 2, %s475
    %s477 = scalar_lea.sflag [#allocation3], %s476
    %479 = dma.done %s477, 16
  $region149: #{eos_encouragement_loss.1} parent=0 // pred_fallthru
    _
  %s480 = sadd.s32 %s442, 3
  %p481 = scmp.lt.s32.totalorder %s480, 3
  // Predicated region
  $region150: #{eos_encouragement_loss.1} parent=0 // pred_check
    %p482 = pneg %p481
  $region151: #{eos_encouragement_loss.1} parent=0 // pred_check_branch
    %484 = sbr.rel (%p482) target = $region153
  $region152: #{eos_encouragement_loss.1} parent=0 // pred_region
    %p485 = scmp.lt.s32.totalorder %s480, 2
    %s486 = scalar_select %p485, %s480, 2
    %s487 = sld [smem:[#allocation5 + %s486]]
    %s488 = smul.u32 %s32, 8
    %s489 = sadd.s32 3, %s488
    %s490 = scalar_lea.sflag [#allocation3], %s489
    %492 = dma.done %s490, 16
  $region153: #{eos_encouragement_loss.1} parent=0 // pred_fallthru
    _
  %s493 = sadd.s32 %s442, 4
  %p494 = scmp.lt.s32.totalorder %s493, 3
  // Predicated region
  $region154: #{eos_encouragement_loss.1} parent=0 // pred_check
    %p495 = pneg %p494
  $region155: #{eos_encouragement_loss.1} parent=0 // pred_check_branch
    %497 = sbr.rel (%p495) target = $region157
  $region156: #{eos_encouragement_loss.1} parent=0 // pred_region
    %p498 = scmp.lt.s32.totalorder %s493, 2
    %s499 = scalar_select %p498, %s493, 2
    %s500 = sld [smem:[#allocation5 + %s499]]
    %s501 = smul.u32 %s32, 8
    %s502 = sadd.s32 4, %s501
    %s503 = scalar_lea.sflag [#allocation3], %s502
    %505 = dma.done %s503, 16
  $region157: #{eos_encouragement_loss.1} parent=0 // pred_fallthru
    _
  %s506 = sadd.s32 %s442, 5
  %p507 = scmp.lt.s32.totalorder %s506, 3
  // Predicated region
  $region158: #{eos_encouragement_loss.1} parent=0 // pred_check
    %p508 = pneg %p507
  $region159: #{eos_encouragement_loss.1} parent=0 // pred_check_branch
    %510 = sbr.rel (%p508) target = $region161
  $region160: #{eos_encouragement_loss.1} parent=0 // pred_region
    %p511 = scmp.lt.s32.totalorder %s506, 2
    %s512 = scalar_select %p511, %s506, 2
    %s513 = sld [smem:[#allocation5 + %s512]]
    %s514 = smul.u32 %s32, 8
    %s515 = sadd.s32 5, %s514
    %s516 = scalar_lea.sflag [#allocation3], %s515
    %518 = dma.done %s516, 16
  $region161: #{eos_encouragement_loss.1} parent=0 // pred_fallthru
    _
  %s519 = sadd.s32 %s442, 6
  %p520 = scmp.lt.s32.totalorder %s519, 3
  // Predicated region
  $region162: #{eos_encouragement_loss.1} parent=0 // pred_check
    %p521 = pneg %p520
  $region163: #{eos_encouragement_loss.1} parent=0 // pred_check_branch
    %523 = sbr.rel (%p521) target = $region165
  $region164: #{eos_encouragement_loss.1} parent=0 // pred_region
    %p524 = scmp.lt.s32.totalorder %s519, 2
    %s525 = scalar_select %p524, %s519, 2
    %s526 = sld [smem:[#allocation5 + %s525]]
    %s527 = smul.u32 %s32, 8
    %s528 = sadd.s32 6, %s527
    %s529 = scalar_lea.sflag [#allocation3], %s528
    %531 = dma.done %s529, 16
  $region165: #{eos_encouragement_loss.1} parent=0 // pred_fallthru
    _
  %s532 = sadd.s32 %s442, 7
  %p533 = scmp.lt.s32.totalorder %s532, 3
  // Predicated region
  $region166: #{eos_encouragement_loss.1} parent=0 // pred_check
    %p534 = pneg %p533
  $region167: #{eos_encouragement_loss.1} parent=0 // pred_check_branch
    %536 = sbr.rel (%p534) target = $region169
  $region168: #{eos_encouragement_loss.1} parent=0 // pred_region
    %p537 = scmp.lt.s32.totalorder %s532, 2
    %s538 = scalar_select %p537, %s532, 2
    %s539 = sld [smem:[#allocation5 + %s538]]
    %s540 = smul.u32 %s32, 8
    %s541 = sadd.s32 7, %s540
    %s542 = scalar_lea.sflag [#allocation3], %s541
    %544 = dma.done %s542, 16
  $region169: #{eos_encouragement_loss.1} parent=0 // pred_fallthru
    _
  %s545 = smul.u32 %s32, 8
  %s546 = scalar_lea.vmem [#allocation2], %s545
  %v547 = vld [vmem:[%s546] sm:$0xff]
  %548 = vmax.xlane.f32.xlu0 %v547
  %v549 = vpop.xlane.xlu0 %548
  %v550 = vsub.f32 %v547, %v549
  %v551 = vmul.f32 %v550, 1.442695
  %v552 = vpow.pop %v551
  %553 = vadd.xlane.f32.xlu0 %v552
  %v554 = vpop.xlane.xlu0 %553
  %v555 = vlaneseq
  %v556 = vand.u32 %v555, 127
  %vm557 = vcmp.eq.s32.totalorder %v556, 3
  %v558 = vsel %vm557, %v547, 0.0
  %559 = vadd.xlane.f32.xlu0 %v558
  %v560 = vpop.xlane.xlu0 %559
  %v561 = vsub.f32 %v560, %v549
  %v562 = vmul.f32 %v561, 1.442695
  %v563 = vpow.pop %v562
  %v564 = vrcp.pop %v554
  %v565 = vmul.f32 %v563, %v564
  %vm566 = vcmask 7168
  %567 = vst.msk [vmem:[%s22] sm:$0xff] %vm566, %v565
  %s568 = sadd.s32 0, 0
  %p569 = scmp.lt.s32.totalorder %s568, 0
  %s570 = scalar_select %p569, %s568, 0
  %s571 = smul.addr %s570, 8
  %s572 = scalar_lea.vmem %s2, %s571
  // Predicated region
  $region170: #{eos_encouragement_loss.1} parent=0 // pred_check
    _
  $region171: #{eos_encouragement_loss.1} parent=0 // pred_check_branch
    %574 = sbr.rel (0) target = $region173
  $region172: #{eos_encouragement_loss.1} parent=0 // pred_region
    %s575 = sadd.s32 0, 0
  $region173: #{eos_encouragement_loss.1} parent=0 // pred_fallthru
    _
  // Predicated region
  $region174: #{eos_encouragement_loss.1} parent=0 // pred_check
    _
  $region175: #{eos_encouragement_loss.1} parent=0 // pred_check_branch
    %577 = sbr.rel (0) target = $region177
  $region176: #{eos_encouragement_loss.1} parent=0 // pred_region
    %s578 = sadd.s32 0, 0
    %p579 = scmp.lt.s32.totalorder %s578, 0
    %s580 = scalar_select %p579, %s578, 0
    %s581 = smul.addr %s580, 8
    %s582 = scalar_lea.vmem %s2, %s581
  $region177: #{eos_encouragement_loss.1} parent=0 // pred_fallthru
    _
  %583 = vsyncmov [#allocation3]
  %s584 = vpop.sfrf %583
  %p585 = scmp.eq.s32.totalorder %s584, 0
  %p586 = pneg %p585
  %588 = shalt.err (%p586)
  %s589 = scalar_lea.sflag [#allocation3], 1
  %590 = vsyncmov %s589
  %s591 = vpop.sfrf %590
  %p592 = scmp.eq.s32.totalorder %s591, 0
  %p593 = pneg %p592
  %595 = shalt.err (%p593)
  %s596 = scalar_lea.sflag [#allocation3], 2
  %597 = vsyncmov %s596
  %s598 = vpop.sfrf %597
  %p599 = scmp.eq.s32.totalorder %s598, 0
  %p600 = pneg %p599
  %602 = shalt.err (%p600)
  %s603 = scalar_lea.sflag [#allocation3], 3
  %604 = vsyncmov %s603
  %s605 = vpop.sfrf %604
  %p606 = scmp.eq.s32.totalorder %s605, 0
  %p607 = pneg %p606
  %609 = shalt.err (%p607)
  %s610 = scalar_lea.sflag [#allocation3], 4
  %611 = vsyncmov %s610
  %s612 = vpop.sfrf %611
  %p613 = scmp.eq.s32.totalorder %s612, 0
  %p614 = pneg %p613
  %616 = shalt.err (%p614)
  %s617 = scalar_lea.sflag [#allocation3], 5
  %618 = vsyncmov %s617
  %s619 = vpop.sfrf %618
  %p620 = scmp.eq.s32.totalorder %s619, 0
  %p621 = pneg %p620
  %623 = shalt.err (%p621)
  %s624 = scalar_lea.sflag [#allocation3], 6
  %625 = vsyncmov %s624
  %s626 = vpop.sfrf %625
  %p627 = scmp.eq.s32.totalorder %s626, 0
  %p628 = pneg %p627
  %630 = shalt.err (%p628)
  %s631 = scalar_lea.sflag [#allocation3], 7
  %632 = vsyncmov %s631
  %s633 = vpop.sfrf %632
  %p634 = scmp.eq.s32.totalorder %s633, 0
  %p635 = pneg %p634
  %637 = shalt.err (%p635)
  %s638 = scalar_lea.sflag [#allocation3], 8
  %639 = vsyncmov %s638
  %s640 = vpop.sfrf %639
  %p641 = scmp.eq.s32.totalorder %s640, 0
  %p642 = pneg %p641
  %644 = shalt.err (%p642)
  %s645 = scalar_lea.sflag [#allocation3], 9
  %646 = vsyncmov %s645
  %s647 = vpop.sfrf %646
  %p648 = scmp.eq.s32.totalorder %s647, 0
  %p649 = pneg %p648
  %651 = shalt.err (%p649)
  %s652 = scalar_lea.sflag [#allocation3], 10
  %653 = vsyncmov %s652
  %s654 = vpop.sfrf %653
  %p655 = scmp.eq.s32.totalorder %s654, 0
  %p656 = pneg %p655
  %658 = shalt.err (%p656)
  %s659 = scalar_lea.sflag [#allocation3], 11
  %660 = vsyncmov %s659
  %s661 = vpop.sfrf %660
  %p662 = scmp.eq.s32.totalorder %s661, 0
  %p663 = pneg %p662
  %665 = shalt.err (%p663)
  %s666 = scalar_lea.sflag [#allocation3], 12
  %667 = vsyncmov %s666
  %s668 = vpop.sfrf %667
  %p669 = scmp.eq.s32.totalorder %s668, 0
  %p670 = pneg %p669
  %672 = shalt.err (%p670)
  %s673 = scalar_lea.sflag [#allocation3], 13
  %674 = vsyncmov %s673
  %s675 = vpop.sfrf %674
  %p676 = scmp.eq.s32.totalorder %s675, 0
  %p677 = pneg %p676
  %679 = shalt.err (%p677)
  %s680 = scalar_lea.sflag [#allocation3], 14
  %681 = vsyncmov %s680
  %s682 = vpop.sfrf %681
  %p683 = scmp.eq.s32.totalorder %s682, 0
  %p684 = pneg %p683
  %686 = shalt.err (%p684)
  %s687 = scalar_lea.sflag [#allocation3], 15
  %688 = vsyncmov %s687
  %s689 = vpop.sfrf %688
  %p690 = scmp.eq.s32.totalorder %s689, 0
  %p691 = pneg %p690
  %693 = shalt.err (%p691)

</llo_original>
